<compile_context>
chip_gen: v7x
topology: tpu7x:2x2x1
jax: 0.10.0
libtpu: 0.0.40
codegen_flags: <defaults>
</compile_context>

<pallas_src>
import math

import jax
import jax.numpy as jnp
from jax import lax
from jax.experimental import pallas as pl
from jax.experimental.pallas import tpu as pltpu

ATTN_SCALE = 1.0 / math.sqrt(64.0)   # the module hard-codes np.sqrt(64)
NEG_BIG = -1e9                        # the module's masked_fill value


# ---------------------------------------------------------------------------
# Kernel: one (head-group, q-tile, kv-tile) step of online-softmax attention
# ---------------------------------------------------------------------------
def _flash_sdpa_kernel(q_ref, k_ref, v_ref, mask_ref, o_ref, m_sc, l_sc, acc_sc):
    # Block shapes:
    #   q_ref    (hb, tq,  Dk)
    #   k_ref    (hb, tkv, Dk)
    #   v_ref    (hb, tkv, Dk)
    #   mask_ref (hb, tq, tkv) int8   or (tq, tkv) int8 for a shared mask
    #   o_ref    (hb, tq,  Dk)        written once, at the last kv step
    #   scratch  m/l (hb, tq, 1) f32, acc (hb, tq, Dk) f32 (persist across kv steps)
    kv_i = pl.program_id(2)

    @pl.when(kv_i == 0)
    def _init():
        m_sc[...] = jnp.full(m_sc.shape, -jnp.inf, m_sc.dtype)
        l_sc[...] = jnp.zeros(l_sc.shape, l_sc.dtype)
        acc_sc[...] = jnp.zeros(acc_sc.shape, acc_sc.dtype)

    # scores = Q @ K^T / sqrt(64): contract the last dims directly (no transpose
    # -> no XLU pass), batched over the head dim, f32 accumulation on the MXU.
    s = lax.dot_general(q_ref[...], k_ref[...],
                        (((2,), (2,)), ((0,), (0,))),
                        preferred_element_type=jnp.float32) * ATTN_SCALE
    # masked_fill(attn_mask, -1e9); a shared (tq,tkv) mask broadcasts over heads.
    s = jnp.where(mask_ref[...] != 0, jnp.float32(NEG_BIG), s)

    # Online (numerically stable) softmax update.
    m_prev = m_sc[...]
    m_new = jnp.maximum(m_prev, jnp.max(s, axis=-1, keepdims=True))
    alpha = jnp.exp(m_prev - m_new)                    # rescale previous partials
    p = jnp.exp(s - m_new)
    l_sc[...] = alpha * l_sc[...] + jnp.sum(p, axis=-1, keepdims=True)

    # context partial: attn-tile @ V-tile; operands stay in the input dtype
    # (bf16 inputs -> native MXU rate), accumulation stays f32.
    pv = lax.dot_general(p.astype(v_ref.dtype), v_ref[...],
                         (((2,), (1,)), ((0,), (0,))),
                         preferred_element_type=jnp.float32)
    acc_sc[...] = alpha * acc_sc[...] + pv
    m_sc[...] = m_new

    # TODO(synk): nn.Dropout(0.3) on attn is identity here (eval mode); training
    # parity would need pltpu.prng_seed/prng_random_bits dropout with 1/(1-p) scaling.

    @pl.when(kv_i == pl.num_programs(2) - 1)
    def _finalize():
        # Exact division (previous approx reciprocal caused the correctness failure).
        o_ref[...] = (acc_sc[...] / l_sc[...]).astype(o_ref.dtype)


# ---------------------------------------------------------------------------
# Tile / grouping heuristics
# ---------------------------------------------------------------------------
def _pick_seq_tiles(S):
    # Tile the sequence only when it splits into lane-aligned 128-wide tiles;
    # otherwise keep the full extent (the (8,128) rule binds only on non-full dims).
    # TODO(synk): on v6e/v5e a 256-wide kv tile (+ ~96 MiB vmem limit) amortizes
    # grid overhead better; 48 MiB / 128-wide is the v7x-safe default used here.
    t = 128 if (S > 128 and S % 128 == 0) else S
    return t, t


def _pick_heads_per_block(G, S, Dk, tq, tkv, itemsize,
                          budget_bytes=12 * 1024 * 1024):
    """Largest divisor of G=B*H whose per-step working set fits the VMEM budget,
    preferring >= 2 grid groups so both v7x TensorCores get work."""
    def footprint(hb):
        qkvo = 2 * (2 * hb * tq * Dk + 2 * hb * tkv * Dk) * itemsize  # dbl-buffered
        mask = 2 * hb * tq * tkv                                      # int8
        scratch = hb * tq * (Dk + 2) * 4                              # m, l, acc (f32)
        interm = 4 * hb * tq * tkv * 4                                # s, p, ...
        return qkvo + mask + scratch + interm

    divisors = [d for d in range(1, G + 1) if G % d == 0]
    fitting = [d for d in divisors if footprint(d) <= budget_bytes] or [1]
    if G >= 2:
        pref = [d for d in fitting if G // d >= 2]
        if pref:
            return max(pref)
    return max(fitting)


# ---------------------------------------------------------------------------
# Wrapper
# ---------------------------------------------------------------------------
@jax.jit
def scaled_dot_product_attention(Q, K, V, attn_mask):
    """Forward of ScaledDotProductAttention (eval mode).

    Q, K, V: (B, H, S, Dk).  attn_mask: broadcastable to (B, H, S, S); nonzero /
    True means "masked".  A shared mask ((S,S) or (1,1,S,S)) stays resident in
    VMEM; a full (B,H,S,S) mask is streamed as int8 tiles.
    """
    B, H, S, Dk = Q.shape
    G = B * H
    q3 = Q.reshape(G, S, Dk)
    k3 = K.reshape(G, S, Dk)
    v3 = V.reshape(G, S, Dk)

    tq, tkv = _pick_seq_tiles(S)
    hb = _pick_heads_per_block(G, S, Dk, tq, tkv, Q.dtype.itemsize)
    grid = (G // hb, S // tq, S // tkv)

    qo_spec = pl.BlockSpec((hb, tq, Dk), lambda g, qi, ki: (g, qi, 0))
    k_spec = pl.BlockSpec((hb, tkv, Dk), lambda g, qi, ki: (g, ki, 0))
    v_spec = pl.BlockSpec((hb, tkv, Dk), lambda g, qi, ki: (g, ki, 0))

    shared_mask = attn_mask.ndim == 2 or (
        attn_mask.ndim == 4 and attn_mask.shape[0] == 1 and attn_mask.shape[1] == 1)
    if shared_mask:
        # Single (S,S) int8 mask; index_map ignores the group axis -> DMA'd once
        # per (q,kv) tile and kept resident instead of streamed per head.
        mask_arr = attn_mask.reshape(S, S).astype(jnp.int8)
        mask_spec = pl.BlockSpec((tq, tkv), lambda g, qi, ki: (qi, ki))
    else:
        # General per-(batch,head) mask, streamed as int8 (4x less than int32).
        mask_arr = jnp.broadcast_to(attn_mask, (B, H, S, S)).reshape(G, S, S)
        mask_arr = mask_arr.astype(jnp.int8)
        mask_spec = pl.BlockSpec((hb, tq, tkv), lambda g, qi, ki: (g, qi, ki))

    out = pl.pallas_call(
        _flash_sdpa_kernel,
        out_shape=jax.ShapeDtypeStruct((G, S, Dk), Q.dtype),
        grid=grid,
        in_specs=[qo_spec, k_spec, v_spec, mask_spec],
        out_specs=qo_spec,
        scratch_shapes=[
            pltpu.VMEM((hb, tq, 1), jnp.float32),    # running max m
            pltpu.VMEM((hb, tq, 1), jnp.float32),    # running denom l
            pltpu.VMEM((hb, tq, Dk), jnp.float32),   # running numerator acc
        ],
        compiler_params=pltpu.CompilerParams(
            dimension_semantics=("parallel", "parallel", "arbitrary"),
            # 48 MiB fits v7x's 64 MiB physical VMEM; v5e/v6e (128 MiB) can go ~96 MiB.
            vmem_limit_bytes=48 * 1024 * 1024),
    )(q3, k3, v3, mask_arr)
    return out.reshape(B, H, S, Dk)


# ---------------------------------------------------------------------------
# Pure-JAX reference (module semantics, eval mode)
# ---------------------------------------------------------------------------
def sdpa_ref(Q, K, V, attn_mask):
    scores = jnp.einsum("bhqd,bhkd->bhqk", Q, K,
                        precision=lax.Precision.HIGHEST) * ATTN_SCALE
    scores = jnp.where(attn_mask, NEG_BIG, scores)
    attn = jax.nn.softmax(scores, axis=-1)
    return jnp.einsum("bhqk,bhkd->bhqd", attn, V,
                      precision=lax.Precision.HIGHEST)


if __name__ == "__main__":
    B, H, S, Dk = 2, 12, 8, 64      # d_k = 64 fixed by the module's sqrt(64)
    key = jax.random.PRNGKey(0)
    kq, kk, kv_ = jax.random.split(key, 3)
    Q = jax.random.normal(kq, (B, H, S, Dk), jnp.float32)
    K = jax.random.normal(kk, (B, H, S, Dk), jnp.float32)
    V = jax.random.normal(kv_, (B, H, S, Dk), jnp.float32)
    causal = jnp.triu(jnp.ones((S, S), jnp.bool_), k=1)   # True => masked
    full_mask = jnp.broadcast_to(causal, (B, H, S, S))

    ref = sdpa_ref(Q, K, V, full_mask)

    # 1) f32 inputs + full (B,H,S,S) mask (streamed as int8 tiles): tight tolerance.
    out = jax.block_until_ready(scaled_dot_product_attention(Q, K, V, full_mask))
    assert out.shape == (B, H, S, Dk)
    assert jnp.allclose(out, ref, atol=2e-3, rtol=2e-3), "f32 path mismatch vs reference"

    # 2) bf16 inputs + shared (S,S) mask (resident mask, native-rate bf16 MXU operands):
    #    bf16-level tolerance vs. the f32 reference.
    out_bf16 = jax.block_until_ready(
        scaled_dot_product_attention(Q.astype(jnp.bfloat16), K.astype(jnp.bfloat16),
                                     V.astype(jnp.bfloat16), causal))
    assert out_bf16.shape == (B, H, S, Dk)
    assert jnp.allclose(out_bf16.astype(jnp.float32), ref, atol=3e-2, rtol=3e-2), \
        "bf16 path mismatch vs reference"

    print("KERNEL_OK")
</pallas_src>

<mosaic_0001>
module attributes {stable_mosaic.version = 11 : i64} {
  func.func @_flash_sdpa_kernel(%arg0: i32, %arg1: i32, %arg2: i32, %arg3: memref<12x8x64xf32, #tpu.memory_space<vmem>>, %arg4: memref<12x8x64xf32, #tpu.memory_space<vmem>>, %arg5: memref<12x8x64xf32, #tpu.memory_space<vmem>>, %arg6: memref<12x8x8xi8, #tpu.memory_space<vmem>>, %arg7: memref<12x8x64xf32, #tpu.memory_space<vmem>>, %arg8: memref<12x8x1xf32, #tpu.memory_space<vmem>>, %arg9: memref<12x8x1xf32, #tpu.memory_space<vmem>>, %arg10: memref<12x8x64xf32, #tpu.memory_space<vmem>>) attributes {dimension_semantics = [#tpu.dimension_semantics<parallel>, #tpu.dimension_semantics<parallel>, #tpu.dimension_semantics<arbitrary>], iteration_bounds = array<i64: 2, 1, 1>, scalar_prefetch = 0 : i64, scratch_operands = 3 : i64, tpu.core_type = #tpu.core_type<tc>, window_params = [{transform_indices = @transform_0, window_bounds = array<i64: 12, 8, 64>}, {transform_indices = @transform_1, window_bounds = array<i64: 12, 8, 64>}, {transform_indices = @transform_2, window_bounds = array<i64: 12, 8, 64>}, {transform_indices = @transform_3, window_bounds = array<i64: 12, 8, 8>}, {transform_indices = @transform_4, window_bounds = array<i64: 12, 8, 64>}]} {
    %c0_i32 = arith.constant 0 : i32
    %0 = arith.cmpi eq, %arg2, %c0_i32 : i32
    %1 = arith.extui %0 : i1 to i32
    %c0_i32_0 = arith.constant 0 : i32
    %2 = arith.cmpi ne, %1, %c0_i32_0 : i32
    scf.if %2 {
      %cst_37 = arith.constant 0xFF800000 : f32
      %39 = vector.broadcast %cst_37 : f32 to vector<12x8x1xf32>
      %c0_38 = arith.constant 0 : index
      %c0_39 = arith.constant 0 : index
      %c0_40 = arith.constant 0 : index
      %40 = vector.load %arg8[%c0_38, %c0_39, %c0_40] : memref<12x8x1xf32, #tpu.memory_space<vmem>>, vector<12x8x1xf32>
      tpu.vector_store %arg8[%c0_38, %c0_39, %c0_40], %39 {strides = array<i32>} : memref<12x8x1xf32, #tpu.memory_space<vmem>>, vector<12x8x1xf32>,
      %cst_41 = arith.constant 0.000000e+00 : f32
      %41 = vector.broadcast %cst_41 : f32 to vector<12x8x1xf32>
      %c0_42 = arith.constant 0 : index
      %c0_43 = arith.constant 0 : index
      %c0_44 = arith.constant 0 : index
      %42 = vector.load %arg9[%c0_42, %c0_43, %c0_44] : memref<12x8x1xf32, #tpu.memory_space<vmem>>, vector<12x8x1xf32>
      tpu.vector_store %arg9[%c0_42, %c0_43, %c0_44], %41 {strides = array<i32>} : memref<12x8x1xf32, #tpu.memory_space<vmem>>, vector<12x8x1xf32>,
      %cst_45 = arith.constant 0.000000e+00 : f32
      %43 = vector.broadcast %cst_45 : f32 to vector<12x8x64xf32>
      %c0_46 = arith.constant 0 : index
      %c0_47 = arith.constant 0 : index
      %c0_48 = arith.constant 0 : index
      %44 = vector.load %arg10[%c0_46, %c0_47, %c0_48] : memref<12x8x64xf32, #tpu.memory_space<vmem>>, vector<12x8x64xf32>
      tpu.vector_store %arg10[%c0_46, %c0_47, %c0_48], %43 {strides = array<i32>} : memref<12x8x64xf32, #tpu.memory_space<vmem>>, vector<12x8x64xf32>,
    } else {
    }
    %c0 = arith.constant 0 : index
    %c0_1 = arith.constant 0 : index
    %c0_2 = arith.constant 0 : index
    %3 = vector.load %arg3[%c0, %c0_1, %c0_2] : memref<12x8x64xf32, #tpu.memory_space<vmem>>, vector<12x8x64xf32>
    %c0_3 = arith.constant 0 : index
    %c0_4 = arith.constant 0 : index
    %c0_5 = arith.constant 0 : index
    %4 = vector.load %arg4[%c0_3, %c0_4, %c0_5] : memref<12x8x64xf32, #tpu.memory_space<vmem>>, vector<12x8x64xf32>
    %cst = arith.constant dense<0.000000e+00> : vector<12x8x8xf32>
    %5 = tpu.matmul %3, %4, %cst {dimension_numbers = #tpu.dot_dimension_numbers<[2], [2], [1], [1], [0, 0, 0, 1, 1, 1], [0], [0]>} : vector<12x8x64xf32>, vector<12x8x64xf32>, vector<12x8x8xf32> -> vector<12x8x8xf32>
    %cst_6 = arith.constant 1.250000e-01 : f32
    %6 = vector.broadcast %cst_6 : f32 to vector<12x8x8xf32>
    %7 = arith.mulf %5, %6 : vector<12x8x8xf32>
    %c0_7 = arith.constant 0 : index
    %c0_8 = arith.constant 0 : index
    %c0_9 = arith.constant 0 : index
    %8 = vector.load %arg6[%c0_7, %c0_8, %c0_9] : memref<12x8x8xi8, #tpu.memory_space<vmem>>, vector<12x8x8xi8>
    %c0_i8 = arith.constant 0 : i8
    %9 = vector.broadcast %c0_i8 : i8 to vector<12x8x8xi8>
    %10 = arith.cmpi ne, %8, %9 : vector<12x8x8xi8>
    %cst_10 = arith.constant -1.000000e+09 : f32
    %11 = vector.broadcast %cst_10 : f32 to vector<12x8x8xf32>
    %12 = arith.select %10, %11, %7 : vector<12x8x8xi1>, vector<12x8x8xf32>
    %c0_11 = arith.constant 0 : index
    %c0_12 = arith.constant 0 : index
    %c0_13 = arith.constant 0 : index
    %13 = vector.load %arg8[%c0_11, %c0_12, %c0_13] : memref<12x8x1xf32, #tpu.memory_space<vmem>>, vector<12x8x1xf32>
    %cst_14 = arith.constant dense<0xFF800000> : vector<12x8xf32>
    %14 = vector.multi_reduction <maximumf>, %12, %cst_14 [2] : vector<12x8x8xf32> to vector<12x8xf32>
    %15 = vector.shape_cast %14 : vector<12x8xf32> to vector<12x8x1xf32>
    %16 = arith.maximumf %13, %15 : vector<12x8x1xf32>
    %17 = arith.subf %13, %16 : vector<12x8x1xf32>
    %18 = math.exp %17 : vector<12x8x1xf32>
    %19 = vector.broadcast %16 : vector<12x8x1xf32> to vector<12x8x8xf32>
    %20 = arith.subf %12, %19 : vector<12x8x8xf32>
    %21 = math.exp %20 : vector<12x8x8xf32>
    %c0_15 = arith.constant 0 : index
    %c0_16 = arith.constant 0 : index
    %c0_17 = arith.constant 0 : index
    %22 = vector.load %arg9[%c0_15, %c0_16, %c0_17] : memref<12x8x1xf32, #tpu.memory_space<vmem>>, vector<12x8x1xf32>
    %23 = arith.mulf %18, %22 : vector<12x8x1xf32>
    %cst_18 = arith.constant dense<0.000000e+00> : vector<12x8xf32>
    %24 = vector.multi_reduction <add>, %21, %cst_18 [2] : vector<12x8x8xf32> to vector<12x8xf32>
    %25 = vector.shape_cast %24 : vector<12x8xf32> to vector<12x8x1xf32>
    %26 = arith.addf %23, %25 : vector<12x8x1xf32>
    %c0_19 = arith.constant 0 : index
    %c0_20 = arith.constant 0 : index
    %c0_21 = arith.constant 0 : index
    %27 = vector.load %arg9[%c0_19, %c0_20, %c0_21] : memref<12x8x1xf32, #tpu.memory_space<vmem>>, vector<12x8x1xf32>
    tpu.vector_store %arg9[%c0_19, %c0_20, %c0_21], %26 {strides = array<i32>} : memref<12x8x1xf32, #tpu.memory_space<vmem>>, vector<12x8x1xf32>,
    %c0_22 = arith.constant 0 : index
    %c0_23 = arith.constant 0 : index
    %c0_24 = arith.constant 0 : index
    %28 = vector.load %arg5[%c0_22, %c0_23, %c0_24] : memref<12x8x64xf32, #tpu.memory_space<vmem>>, vector<12x8x64xf32>
    %cst_25 = arith.constant dense<0.000000e+00> : vector<12x8x64xf32>
    %29 = tpu.matmul %21, %28, %cst_25 {dimension_numbers = #tpu.dot_dimension_numbers<[2], [1], [1], [2], [0, 0, 0, 1, 1, 2], [0], [0]>} : vector<12x8x8xf32>, vector<12x8x64xf32>, vector<12x8x64xf32> -> vector<12x8x64xf32>
    %c0_26 = arith.constant 0 : index
    %c0_27 = arith.constant 0 : index
    %c0_28 = arith.constant 0 : index
    %30 = vector.load %arg10[%c0_26, %c0_27, %c0_28] : memref<12x8x64xf32, #tpu.memory_space<vmem>>, vector<12x8x64xf32>
    %31 = vector.broadcast %18 : vector<12x8x1xf32> to vector<12x8x64xf32>
    %32 = arith.mulf %31, %30 : vector<12x8x64xf32>
    %33 = arith.addf %32, %29 : vector<12x8x64xf32>
    %c0_29 = arith.constant 0 : index
    %c0_30 = arith.constant 0 : index
    %c0_31 = arith.constant 0 : index
    %34 = vector.load %arg10[%c0_29, %c0_30, %c0_31] : memref<12x8x64xf32, #tpu.memory_space<vmem>>, vector<12x8x64xf32>
    tpu.vector_store %arg10[%c0_29, %c0_30, %c0_31], %33 {strides = array<i32>} : memref<12x8x64xf32, #tpu.memory_space<vmem>>, vector<12x8x64xf32>,
    %c0_32 = arith.constant 0 : index
    %c0_33 = arith.constant 0 : index
    %c0_34 = arith.constant 0 : index
    %35 = vector.load %arg8[%c0_32, %c0_33, %c0_34] : memref<12x8x1xf32, #tpu.memory_space<vmem>>, vector<12x8x1xf32>
    tpu.vector_store %arg8[%c0_32, %c0_33, %c0_34], %16 {strides = array<i32>} : memref<12x8x1xf32, #tpu.memory_space<vmem>>, vector<12x8x1xf32>,
    %c0_i32_35 = arith.constant 0 : i32
    %36 = arith.cmpi eq, %arg2, %c0_i32_35 : i32
    %37 = arith.extui %36 : i1 to i32
    %c0_i32_36 = arith.constant 0 : i32
    %38 = arith.cmpi ne, %37, %c0_i32_36 : i32
    scf.if %38 {
      %c0_37 = arith.constant 0 : index
      %c0_38 = arith.constant 0 : index
      %c0_39 = arith.constant 0 : index
      %39 = vector.load %arg10[%c0_37, %c0_38, %c0_39] : memref<12x8x64xf32, #tpu.memory_space<vmem>>, vector<12x8x64xf32>
      %c0_40 = arith.constant 0 : index
      %c0_41 = arith.constant 0 : index
      %c0_42 = arith.constant 0 : index
      %40 = vector.load %arg9[%c0_40, %c0_41, %c0_42] : memref<12x8x1xf32, #tpu.memory_space<vmem>>, vector<12x8x1xf32>
      %41 = vector.broadcast %40 : vector<12x8x1xf32> to vector<12x8x64xf32>
      %42 = arith.divf %39, %41 : vector<12x8x64xf32>
      %c0_43 = arith.constant 0 : index
      %c0_44 = arith.constant 0 : index
      %c0_45 = arith.constant 0 : index
      %43 = vector.load %arg7[%c0_43, %c0_44, %c0_45] : memref<12x8x64xf32, #tpu.memory_space<vmem>>, vector<12x8x64xf32>
      tpu.vector_store %arg7[%c0_43, %c0_44, %c0_45], %42 {strides = array<i32>} : memref<12x8x64xf32, #tpu.memory_space<vmem>>, vector<12x8x64xf32>,
    } else {
    }
    return
  }
  func.func @transform_0(%arg0: i32, %arg1: i32, %arg2: i32) -> (i32, i32, i32) {
    %c0_i32 = arith.constant 0 : i32
    %c0_i32_0 = arith.constant 0 : i32
    return %arg0, %arg1, %c0_i32 : i32, i32, i32
  }
  func.func @transform_1(%arg0: i32, %arg1: i32, %arg2: i32) -> (i32, i32, i32) {
    %c0_i32 = arith.constant 0 : i32
    %c0_i32_0 = arith.constant 0 : i32
    return %arg0, %arg2, %c0_i32 : i32, i32, i32
  }
  func.func @transform_2(%arg0: i32, %arg1: i32, %arg2: i32) -> (i32, i32, i32) {
    %c0_i32 = arith.constant 0 : i32
    %c0_i32_0 = arith.constant 0 : i32
    return %arg0, %arg2, %c0_i32 : i32, i32, i32
  }
  func.func @transform_3(%arg0: i32, %arg1: i32, %arg2: i32) -> (i32, i32, i32) {
    %c0_i32 = arith.constant 0 : i32
    return %arg0, %arg1, %arg2 : i32, i32, i32
  }
  func.func @transform_4(%arg0: i32, %arg1: i32, %arg2: i32) -> (i32, i32, i32) {
    %c0_i32 = arith.constant 0 : i32
    %c0_i32_0 = arith.constant 0 : i32
    return %arg0, %arg1, %c0_i32 : i32, i32, i32
  }
}

</mosaic_0001>

<llo_original>
// kernel: scaled_dot_product_attention.1
$region0: #{scaled_dot_product_attention.1}
  #allocation0 [shape = 'u32[]', space=smem, size = 0x4, offset = 0x4, fixed_abs, tag = 'smem constant byte address 0x4 - core index']
  #allocation1 [shape = 'u32[144,128]{1,0:T(1,128)}', space=vmem, size = 0x12000, scoped, tag = 'internal scratch']
  #allocation2 [shape = 'f32[12,8,1]{2,1,0:T(8,128)}', space=vmem, size = 0xc000, scoped, tag = 'scratch operand']
  #allocation3 [shape = 'f32[12,8,1]{2,1,0:T(8,128)}', space=vmem, size = 0xc000, scoped, tag = 'scratch operand']
  #allocation4 [shape = 'f32[12,8,64]{2,1,0:T(8,128)}', space=vmem, size = 0xc000, scoped, tag = 'scratch operand']
  %s0 = inlined_call_operand.hbm [shape: f32[24,8,64], index: 0, kind: input, shape index: {}]
  %s1 = inlined_call_operand.hbm [shape: f32[24,8,64], index: 1, kind: input, shape index: {}]
  %s2 = inlined_call_operand.hbm [shape: f32[24,8,64], index: 2, kind: input, shape index: {}]
  %s3 = inlined_call_operand.vmem [shape: s8[24,8,8], index: 3, kind: input, shape index: {}]
  %s4 = inlined_call_operand.hbm [shape: f32[24,8,64], index: 4, kind: output, shape index: {}]
  %s5 = sld [smem:[#allocation0]]
  $region69: #{scaled_dot_product_attention.1} parent=0
    _
  %s7 = ssub.s32 1, %s5
  %s8 = scalar_select 0, %s7, %s5
  $region1: #{scaled_dot_product_attention.1} parent=0
    #allocation5 [shape = 'u8[98304]{0}', space=vmem, size = 0x18000, scoped, tag = 'input window, operand 0']
    #allocation6 [shape = 's32[2]{0}', space=sflag, size = 0x8, scoped, tag = 'scoped memory for scaled_dot_product_attention.1']
    #allocation7 [shape = 's32[2]{0}', space=sflag, size = 0x8, scoped, tag = 'scoped memory for scaled_dot_product_attention.1']
    #allocation8 [shape = 'u8[98304]{0}', space=vmem, size = 0x18000, scoped, tag = 'input window, operand 1']
    #allocation9 [shape = 's32[2]{0}', space=sflag, size = 0x8, scoped, tag = 'scoped memory for scaled_dot_product_attention.1']
    #allocation10 [shape = 'u8[98304]{0}', space=vmem, size = 0x18000, scoped, tag = 'input window, operand 2']
    #allocation11 [shape = 'u8[98304]{0}', space=vmem, size = 0x18000, scoped, tag = 'output window, operand 0']
    %9 = vsyncpa [#allocation6], 0
    %s10 = scalar_lea.sflag [#allocation6], 1
    %11 = vsyncpa %s10, 0
    %12 = vsyncpa [#allocation9], 0
    %s13 = scalar_lea.sflag [#allocation9], 1
    %14 = vsyncpa %s13, 0
    %15 = vsyncpa [#allocation7], 0
    %s16 = scalar_lea.sflag [#allocation7], 1
    %17 = vsyncpa %s16, 0
    loop: start=0, step=1, limit=4
    $region2: #{scaled_dot_product_attention.1} parent=1 // loop_pre_header
      _
    $region3: #{scaled_dot_product_attention.1} parent=1 // loop_header
      %s19 = sphi 0, %s23
      %p20 = scmp.ge.s32.totalorder %s19, 4
      %s26 = sphi 0, %s45
      %s27 = sphi 0, %s41
      %s28 = sphi 0, %s37
      %s29 = sphi 0, %s26
      %s30 = sphi 0, %s27
      %s31 = sphi 0, %s28
      %s32 = sphi 0, %s29
      %s33 = sphi 0, %s30
      %s34 = sphi 0, %s31
      %s50 = sphi 0, %s52
      %s53 = sphi 0, %s50
      %s54 = sphi 0, %s53
      %s70 = sphi 0, %s54
      %s78 = sphi 0, %s80
      %s81 = sphi 0, %s78
      %s82 = sphi 0, %s81
      %s98 = sphi 0, %s82
      %s106 = sphi 0, %s108
      %s109 = sphi 0, %s106
      %s110 = sphi 0, %s109
      %s126 = sphi 0, %s110
      %s136 = sphi 0, %s138
      %s139 = sphi 0, %s136
      %s140 = sphi 0, %s139
      %s156 = sphi 0, %s140
      %s164 = sphi 0, %s166
      %s167 = sphi 0, %s164
      %s168 = sphi 0, %s167
      %s184 = sphi 0, %s168
    $region4: #{scaled_dot_product_attention.1} parent=1 // loop_header_branch
      %22 = sbr.rel (%p20) target = $region8
    $region5: #{scaled_dot_product_attention.1} parent=1 // loop_body
      %s24 = ssub.s32 %s19, 1
      %s25 = ssub.s32 %s19, 2
      %s35 = sadd.s32 1, %s28
      %p36 = scmp.ge.s32.totalorder %s35, 1
      %s37 = scalar_select %p36, 0, %s35
      %s38 = sadd.s32 1, %s27
      %s39 = scalar_select %p36, %s38, %s27
      %p40 = scmp.ge.s32.totalorder %s39, 1
      %s41 = scalar_select %p40, 0, %s39
      %s42 = sadd.s32 1, %s26
      %s43 = scalar_select %p40, %s42, %s26
      %p44 = scmp.ge.s32.totalorder %s43, 2
      %s45 = scalar_select %p44, 0, %s43
      %s46 = ssub.s32 %s26, %s45
      %s47 = ssub.s32 %s27, %s41
      %s48 = sor.u32 %s46, %s47
      %p49 = scmp.eq.s32.totalorder %s48, 0
      %s51 = sadd.s32 %s50, 1
      %s52 = scalar_select %p49, %s50, %s51
      %p55 = pneg %p49
      %p56 = scmp.eq.s32.totalorder %s19, 1
      %p57 = por %p55, %p56
      %p58 = scmp.ne.s32.totalorder %s50, %s53
      %p59 = scmp.eq.s32.totalorder %s19, 0
      %p60 = por %p58, %p59
      %p61 = scmp.ne.s32.totalorder %s50, %s53
      %p62 = scmp.eq.s32.totalorder %s24, 1
      %p63 = por %p61, %p62
      %p64 = scmp.ne.s32.totalorder %s53, %s54
      %p65 = scmp.eq.s32.totalorder %s24, 0
      %p66 = por %p64, %p65
      %p67 = scmp.ne.s32.totalorder %s53, %s54
      %p68 = scmp.eq.s32.totalorder %s25, 1
      %p69 = por %p67, %p68
      %p71 = scmp.ne.s32.totalorder %s54, %s70
      %p72 = scmp.eq.s32.totalorder %s25, 0
      %p73 = por %p71, %p72
      %s74 = ssub.s32 %s26, %s45
      %s75 = ssub.s32 %s28, %s37
      %s76 = sor.u32 %s74, %s75
      %p77 = scmp.eq.s32.totalorder %s76, 0
      %s79 = sadd.s32 %s78, 1
      %s80 = scalar_select %p77, %s78, %s79
      %p83 = pneg %p77
      %p84 = scmp.eq.s32.totalorder %s19, 1
      %p85 = por %p83, %p84
      %p86 = scmp.ne.s32.totalorder %s78, %s81
      %p87 = scmp.eq.s32.totalorder %s19, 0
      %p88 = por %p86, %p87
      %p89 = scmp.ne.s32.totalorder %s78, %s81
      %p90 = scmp.eq.s32.totalorder %s24, 1
      %p91 = por %p89, %p90
      %p92 = scmp.ne.s32.totalorder %s81, %s82
      %p93 = scmp.eq.s32.totalorder %s24, 0
      %p94 = por %p92, %p93
      %p95 = scmp.ne.s32.totalorder %s81, %s82
      %p96 = scmp.eq.s32.totalorder %s25, 1
      %p97 = por %p95, %p96
      %p99 = scmp.ne.s32.totalorder %s82, %s98
      %p100 = scmp.eq.s32.totalorder %s25, 0
      %p101 = por %p99, %p100
      %s102 = ssub.s32 %s26, %s45
      %s103 = ssub.s32 %s28, %s37
      %s104 = sor.u32 %s102, %s103
      %p105 = scmp.eq.s32.totalorder %s104, 0
      %s107 = sadd.s32 %s106, 1
      %s108 = scalar_select %p105, %s106, %s107
      %p111 = pneg %p105
      %p112 = scmp.eq.s32.totalorder %s19, 1
      %p113 = por %p111, %p112
      %p114 = scmp.ne.s32.totalorder %s106, %s109
      %p115 = scmp.eq.s32.totalorder %s19, 0
      %p116 = por %p114, %p115
      %p117 = scmp.ne.s32.totalorder %s106, %s109
      %p118 = scmp.eq.s32.totalorder %s24, 1
      %p119 = por %p117, %p118
      %p120 = scmp.ne.s32.totalorder %s109, %s110
      %p121 = scmp.eq.s32.totalorder %s24, 0
      %p122 = por %p120, %p121
      %p123 = scmp.ne.s32.totalorder %s109, %s110
      %p124 = scmp.eq.s32.totalorder %s25, 1
      %p125 = por %p123, %p124
      %p127 = scmp.ne.s32.totalorder %s110, %s126
      %p128 = scmp.eq.s32.totalorder %s25, 0
      %p129 = por %p127, %p128
      %s130 = ssub.s32 %s26, %s45
      %s131 = ssub.s32 %s27, %s41
      %s132 = sor.u32 %s130, %s131
      %s133 = ssub.s32 %s28, %s37
      %s134 = sor.u32 %s132, %s133
      %p135 = scmp.eq.s32.totalorder %s134, 0
      %s137 = sadd.s32 %s136, 1
      %s138 = scalar_select %p135, %s136, %s137
      %p141 = pneg %p135
      %p142 = scmp.eq.s32.totalorder %s19, 1
      %p143 = por %p141, %p142
      %p144 = scmp.ne.s32.totalorder %s136, %s139
      %p145 = scmp.eq.s32.totalorder %s19, 0
      %p146 = por %p144, %p145
      %p147 = scmp.ne.s32.totalorder %s136, %s139
      %p148 = scmp.eq.s32.totalorder %s24, 1
      %p149 = por %p147, %p148
      %p150 = scmp.ne.s32.totalorder %s139, %s140
      %p151 = scmp.eq.s32.totalorder %s24, 0
      %p152 = por %p150, %p151
      %p153 = scmp.ne.s32.totalorder %s139, %s140
      %p154 = scmp.eq.s32.totalorder %s25, 1
      %p155 = por %p153, %p154
      %p157 = scmp.ne.s32.totalorder %s140, %s156
      %p158 = scmp.eq.s32.totalorder %s25, 0
      %p159 = por %p157, %p158
      %s160 = ssub.s32 %s26, %s45
      %s161 = ssub.s32 %s27, %s41
      %s162 = sor.u32 %s160, %s161
      %p163 = scmp.eq.s32.totalorder %s162, 0
      %s165 = sadd.s32 %s164, 1
      %s166 = scalar_select %p163, %s164, %s165
      %p169 = pneg %p163
      %p170 = scmp.eq.s32.totalorder %s19, 1
      %p171 = por %p169, %p170
      %p172 = scmp.ne.s32.totalorder %s164, %s167
      %p173 = scmp.eq.s32.totalorder %s19, 0
      %p174 = por %p172, %p173
      %p175 = scmp.ne.s32.totalorder %s164, %s167
      %p176 = scmp.eq.s32.totalorder %s24, 1
      %p177 = por %p175, %p176
      %p178 = scmp.ne.s32.totalorder %s167, %s168
      %p179 = scmp.eq.s32.totalorder %s24, 0
      %p180 = por %p178, %p179
      %p181 = scmp.ne.s32.totalorder %s167, %s168
      %p182 = scmp.eq.s32.totalorder %s25, 1
      %p183 = por %p181, %p182
      %p185 = scmp.ne.s32.totalorder %s168, %s184
      %p186 = scmp.eq.s32.totalorder %s25, 0
      %p187 = por %p185, %p186
      %p188 = scmp.le.s32.totalorder 1, %s19
      %p189 = scmp.lt.s32.totalorder %s19, 3
      %p190 = pnand %p188, %p189
      %p191 = pneg %p190
      // Predicated region
      $region9: #{scaled_dot_product_attention.1} parent=5 // pred_check
        _
      $region10: #{scaled_dot_product_attention.1} parent=5 // pred_check_branch
        %193 = sbr.rel (%p190) target = $region12
      $region11: #{scaled_dot_product_attention.1} parent=5 // pred_region
        %s194 = ssub.s32 %s19, 1
      $region12: #{scaled_dot_product_attention.1} parent=5 // pred_fallthru
        _
      %p195 = scmp.lt.s32.totalorder %s19, 2
      // Predicated region
      $region13: #{scaled_dot_product_attention.1} parent=5 // pred_check
        %p196 = pneg %p195
      $region14: #{scaled_dot_product_attention.1} parent=5 // pred_check_branch
        %198 = sbr.rel (%p196) target = $region16
      $region15: #{scaled_dot_product_attention.1} parent=5 // pred_region
        // Predicated region
        $region17: #{scaled_dot_product_attention.1} parent=15 // pred_check
          %p199 = pneg %p60
        $region18: #{scaled_dot_product_attention.1} parent=15 // pred_check_branch
          %201 = sbr.rel (%p199) target = $region20
        $region19: #{scaled_dot_product_attention.1} parent=15 // pred_region
          %s202 = sand.u32 %s50, 1
          %s203 = scalar_lea.sflag [#allocation6], %s202
          %s204 = sand.u32 %s50, 1
          %s205 = smul.addr %s204, 96
          %s206 = scalar_lea.vmem [#allocation5], %s205
          %s207 = smul.u32 12, %s26
          %s209 = ssub.s32 1536, 1536
          %210 = vsyncadd %s203, %s209
          %s211 = sadd.s32 %s27, %s207
          %s212 = smul.addr %s211, 128
          %s213 = scalar_lea.hbm %s0, %s212
          %s214 = sshll.u32 %s206, 4
          %s215 = int_to_ptr.vmem [resolvable:$true] %s214
          %220 = dma.hbm_to_vmem [thread:$0]  %s213, 1536, %s215, %s203, 128, 128, 8
        $region20: #{scaled_dot_product_attention.1} parent=15 // pred_fallthru
          _
        // Predicated region
        $region21: #{scaled_dot_product_attention.1} parent=15 // pred_check
          %p221 = pneg %p88
        $region22: #{scaled_dot_product_attention.1} parent=15 // pred_check_branch
          %223 = sbr.rel (%p221) target = $region24
        $region23: #{scaled_dot_product_attention.1} parent=15 // pred_region
          %s224 = sand.u32 %s19, 1
          %s225 = scalar_lea.sflag [#allocation9], %s224
          %s226 = sand.u32 %s78, 1
          %s227 = smul.addr %s226, 96
          %s228 = scalar_lea.vmem [#allocation8], %s227
          %s229 = smul.u32 12, %s26
          %s231 = ssub.s32 1536, 1536
          %232 = vsyncadd %s225, %s231
          %s233 = sadd.s32 %s28, %s229
          %s234 = smul.addr %s233, 128
          %s235 = scalar_lea.hbm %s1, %s234
          %s236 = sshll.u32 %s228, 4
          %s237 = int_to_ptr.vmem [resolvable:$true] %s236
          %242 = dma.hbm_to_vmem [thread:$0]  %s235, 1536, %s237, %s225, 128, 128, 8
        $region24: #{scaled_dot_product_attention.1} parent=15 // pred_fallthru
          _
        // Predicated region
        $region25: #{scaled_dot_product_attention.1} parent=15 // pred_check
          %p243 = pneg %p116
        $region26: #{scaled_dot_product_attention.1} parent=15 // pred_check_branch
          %245 = sbr.rel (%p243) target = $region28
        $region27: #{scaled_dot_product_attention.1} parent=15 // pred_region
          %s246 = sand.u32 %s19, 1
          %s247 = scalar_lea.sflag [#allocation9], %s246
          %s248 = sand.u32 %s106, 1
          %s249 = smul.addr %s248, 96
          %s250 = scalar_lea.vmem [#allocation10], %s249
          %s251 = smul.u32 12, %s26
          %s253 = ssub.s32 1536, 1536
          %254 = vsyncadd %s247, %s253
          %s255 = sadd.s32 %s28, %s251
          %s256 = smul.addr %s255, 128
          %s257 = scalar_lea.hbm %s2, %s256
          %s258 = sshll.u32 %s250, 4
          %s259 = int_to_ptr.vmem [resolvable:$true] %s258
          %264 = dma.hbm_to_vmem [thread:$0]  %s257, 1536, %s259, %s247, 128, 128, 8
        $region28: #{scaled_dot_product_attention.1} parent=15 // pred_fallthru
          _
        // Predicated region
        $region29: #{scaled_dot_product_attention.1} parent=15 // pred_check
          %p265 = pneg %p146
        $region30: #{scaled_dot_product_attention.1} parent=15 // pred_check_branch
          %267 = sbr.rel (%p265) target = $region32
        $region31: #{scaled_dot_product_attention.1} parent=15 // pred_region
          %s268 = smul.u32 12, %s26
          %p269 = scmp.lt.s32.totalorder %s268, 23
          %s270 = scalar_select %p269, %s268, 23
          %p271 = scmp.lt.s32.totalorder %s27, 0
          %s272 = scalar_select %p271, %s27, 0
          %p273 = scmp.lt.s32.totalorder %s28, 0
          %s274 = scalar_select %p273, %s28, 0
          %s275 = sadd.s32 %s274, %s272
          %s276 = sadd.s32 %s275, %s270
          %s277 = smul.addr %s276, 2
          %s278 = scalar_lea.vmem %s3, %s277
          %s279 = smul.u32 12, %s26
        $region32: #{scaled_dot_product_attention.1} parent=15 // pred_fallthru
          _
      $region16: #{scaled_dot_product_attention.1} parent=5 // pred_fallthru
        _
      %p280 = scmp.le.s32.totalorder 1, %s19
      %p281 = scmp.lt.s32.totalorder %s19, 3
      %p282 = pnand %p280, %p281
      %p283 = pneg %p282
      // Predicated region
      $region33: #{scaled_dot_product_attention.1} parent=5 // pred_check
        _
      $region34: #{scaled_dot_product_attention.1} parent=5 // pred_check_branch
        %285 = sbr.rel (%p282) target = $region36
      $region35: #{scaled_dot_product_attention.1} parent=5 // pred_region
        %s286 = ssub.s32 %s19, 1
        %s287 = sand.u32 %s53, 1
        %s288 = scalar_lea.sflag [#allocation6], %s287
        %s289 = sand.u32 %s53, 1
        %s290 = smul.addr %s289, 96
        %s291 = scalar_lea.vmem [#allocation5], %s290
        // Predicated region
        $region37: #{scaled_dot_product_attention.1} parent=35 // pred_check
          %p292 = pneg %p66
        $region38: #{scaled_dot_product_attention.1} parent=35 // pred_check_branch
          %294 = sbr.rel (%p292) target = $region40
        $region39: #{scaled_dot_product_attention.1} parent=35 // pred_region
          %295 = dma.done %s288, 1536
        $region40: #{scaled_dot_product_attention.1} parent=35 // pred_fallthru
          _
        %s296 = sand.u32 %s24, 1
        %s297 = scalar_lea.sflag [#allocation9], %s296
        %s298 = sand.u32 %s81, 1
        %s299 = smul.addr %s298, 96
        %s300 = scalar_lea.vmem [#allocation8], %s299
        // Predicated region
        $region41: #{scaled_dot_product_attention.1} parent=35 // pred_check
          %p301 = pneg %p94
        $region42: #{scaled_dot_product_attention.1} parent=35 // pred_check_branch
          %303 = sbr.rel (%p301) target = $region44
        $region43: #{scaled_dot_product_attention.1} parent=35 // pred_region
          %304 = dma.done %s297, 1536
        $region44: #{scaled_dot_product_attention.1} parent=35 // pred_fallthru
          _
        %s305 = sand.u32 %s24, 1
        %s306 = scalar_lea.sflag [#allocation9], %s305
        %s307 = sand.u32 %s109, 1
        %s308 = smul.addr %s307, 96
        %s309 = scalar_lea.vmem [#allocation10], %s308
        // Predicated region
        $region45: #{scaled_dot_product_attention.1} parent=35 // pred_check
          %p310 = pneg %p122
        $region46: #{scaled_dot_product_attention.1} parent=35 // pred_check_branch
          %312 = sbr.rel (%p310) target = $region48
        $region47: #{scaled_dot_product_attention.1} parent=35 // pred_region
          %313 = dma.done %s306, 1536
        $region48: #{scaled_dot_product_attention.1} parent=35 // pred_fallthru
          _
        %s314 = sand.u32 %s53, 1
        %s315 = scalar_lea.sflag [#allocation6], %s314
        %s316 = sand.u32 %s53, 1
        %s317 = smul.addr %s316, 96
        %s318 = scalar_lea.vmem [#allocation5], %s317
        %p319 = pneg %p66
        %p320 = pneg %p63
        %s321 = sand.u32 %s24, 1
        %s322 = scalar_lea.sflag [#allocation9], %s321
        %s323 = sand.u32 %s81, 1
        %s324 = smul.addr %s323, 96
        %s325 = scalar_lea.vmem [#allocation8], %s324
        %p326 = pneg %p94
        %p327 = pneg %p91
        %s328 = sand.u32 %s24, 1
        %s329 = scalar_lea.sflag [#allocation9], %s328
        %s330 = sand.u32 %s109, 1
        %s331 = smul.addr %s330, 96
        %s332 = scalar_lea.vmem [#allocation10], %s331
        %p333 = pneg %p122
        %p334 = pneg %p119
        %s335 = smul.u32 12, %s29
        %p336 = scmp.lt.s32.totalorder %s335, 23
        %s337 = scalar_select %p336, %s335, 23
        %p338 = scmp.lt.s32.totalorder %s30, 0
        %s339 = scalar_select %p338, %s30, 0
        %p340 = scmp.lt.s32.totalorder %s31, 0
        %s341 = scalar_select %p340, %s31, 0
        %s342 = sadd.s32 %s341, %s339
        %s343 = sadd.s32 %s342, %s337
        %s344 = smul.addr %s343, 2
        %s345 = scalar_lea.vmem %s3, %s344
        %p346 = pneg %p152
        %p347 = pneg %p149
        %p348 = pneg %p180
        %p349 = pneg %p177
        %s350 = sand.u32 %s167, 1
        %s351 = scalar_lea.sflag [#allocation7], %s350
        %s352 = sand.u32 %s167, 1
        %s353 = smul.addr %s352, 96
        %s354 = scalar_lea.vmem [#allocation11], %s353
        %s355 = smul.u32 12, %s29
        %s356 = smul.u32 12, %s29
        %s357 = smul.u32 12, %s29
        %s358 = smul.u32 12, %s29
        %p359 = scmp.lt.s32.totalorder %s358, 23
        %s360 = scalar_select %p359, %s358, 23
        %p361 = scmp.lt.s32.totalorder %s30, 0
        %s362 = scalar_select %p361, %s30, 0
        %p363 = scmp.lt.s32.totalorder %s31, 0
        %s364 = scalar_select %p363, %s31, 0
        %s365 = sadd.s32 %s364, %s362
        %s366 = sadd.s32 %s365, %s360
        %s367 = smul.addr %s366, 2
        %s368 = scalar_lea.vmem %s3, %s367
        %s369 = smul.u32 12, %s29
        %s370 = smul.u32 12, %s29
        %p373 = scmp.eq.s32.totalorder %s31, 0
        // Predicated region
        $region49: #{scaled_dot_product_attention.1} parent=35 // pred_check
          %p374 = pneg %p373
        $region50: #{scaled_dot_product_attention.1} parent=35 // pred_check_branch
          %376 = sbr.rel (%p374) target = $region52
        $region51: #{scaled_dot_product_attention.1} parent=35 // pred_region
          %vm377 = vcmask 7168
          %378 = vst.msk [vmem:[#allocation2] sm:$0xff] %vm377, -inf
          %379 = vst.msk [vmem:[#allocation2 + $0x8] sm:$0xff] %vm377, -inf
          %380 = vst.msk [vmem:[#allocation2 + $0x10] sm:$0xff] %vm377, -inf
          %381 = vst.msk [vmem:[#allocation2 + $0x18] sm:$0xff] %vm377, -inf
          %382 = vst.msk [vmem:[#allocation2 + $0x20] sm:$0xff] %vm377, -inf
          %383 = vst.msk [vmem:[#allocation2 + $0x28] sm:$0xff] %vm377, -inf
          %384 = vst.msk [vmem:[#allocation2 + $0x30] sm:$0xff] %vm377, -inf
          %385 = vst.msk [vmem:[#allocation2 + $0x38] sm:$0xff] %vm377, -inf
          %386 = vst.msk [vmem:[#allocation2 + $0x40] sm:$0xff] %vm377, -inf
          %387 = vst.msk [vmem:[#allocation2 + $0x48] sm:$0xff] %vm377, -inf
          %388 = vst.msk [vmem:[#allocation2 + $0x50] sm:$0xff] %vm377, -inf
          %389 = vst.msk [vmem:[#allocation2 + $0x58] sm:$0xff] %vm377, -inf
          %390 = vst.msk [vmem:[#allocation3] sm:$0xff] %vm377, 0.0
          %391 = vst.msk [vmem:[#allocation3 + $0x8] sm:$0xff] %vm377, 0.0
          %392 = vst.msk [vmem:[#allocation3 + $0x10] sm:$0xff] %vm377, 0.0
          %393 = vst.msk [vmem:[#allocation3 + $0x18] sm:$0xff] %vm377, 0.0
          %394 = vst.msk [vmem:[#allocation3 + $0x20] sm:$0xff] %vm377, 0.0
          %395 = vst.msk [vmem:[#allocation3 + $0x28] sm:$0xff] %vm377, 0.0
          %396 = vst.msk [vmem:[#allocation3 + $0x30] sm:$0xff] %vm377, 0.0
          %397 = vst.msk [vmem:[#allocation3 + $0x38] sm:$0xff] %vm377, 0.0
          %398 = vst.msk [vmem:[#allocation3 + $0x40] sm:$0xff] %vm377, 0.0
          %399 = vst.msk [vmem:[#allocation3 + $0x48] sm:$0xff] %vm377, 0.0
          %400 = vst.msk [vmem:[#allocation3 + $0x50] sm:$0xff] %vm377, 0.0
          %401 = vst.msk [vmem:[#allocation3 + $0x58] sm:$0xff] %vm377, 0.0
          %vm402 = vcmask 523264
          %403 = vst.msk [vmem:[#allocation4] sm:$0xff] %vm402, 0.0
          %404 = vst.msk [vmem:[#allocation4 + $0x8] sm:$0xff] %vm402, 0.0
          %405 = vst.msk [vmem:[#allocation4 + $0x10] sm:$0xff] %vm402, 0.0
          %406 = vst.msk [vmem:[#allocation4 + $0x18] sm:$0xff] %vm402, 0.0
          %407 = vst.msk [vmem:[#allocation4 + $0x20] sm:$0xff] %vm402, 0.0
          %408 = vst.msk [vmem:[#allocation4 + $0x28] sm:$0xff] %vm402, 0.0
          %409 = vst.msk [vmem:[#allocation4 + $0x30] sm:$0xff] %vm402, 0.0
          %410 = vst.msk [vmem:[#allocation4 + $0x38] sm:$0xff] %vm402, 0.0
          %411 = vst.msk [vmem:[#allocation4 + $0x40] sm:$0xff] %vm402, 0.0
          %412 = vst.msk [vmem:[#allocation4 + $0x48] sm:$0xff] %vm402, 0.0
          %413 = vst.msk [vmem:[#allocation4 + $0x50] sm:$0xff] %vm402, 0.0
          %414 = vst.msk [vmem:[#allocation4 + $0x58] sm:$0xff] %vm402, 0.0
        $region52: #{scaled_dot_product_attention.1} parent=35 // pred_fallthru
          _
        %v415 = vld [vmem:[%s291] sm:$0xff]
        %v416 = vld [vmem:[%s291 + $0x8] sm:$0xff]
        %v417 = vld [vmem:[%s291 + $0x10] sm:$0xff]
        %v418 = vld [vmem:[%s291 + $0x18] sm:$0xff]
        %v419 = vld [vmem:[%s291 + $0x20] sm:$0xff]
        %v420 = vld [vmem:[%s291 + $0x28] sm:$0xff]
        %v421 = vld [vmem:[%s291 + $0x30] sm:$0xff]
        %v422 = vld [vmem:[%s291 + $0x38] sm:$0xff]
        %v423 = vld [vmem:[%s291 + $0x40] sm:$0xff]
        %v424 = vld [vmem:[%s291 + $0x48] sm:$0xff]
        %v425 = vld [vmem:[%s291 + $0x50] sm:$0xff]
        %v426 = vld [vmem:[%s291 + $0x58] sm:$0xff]
        %v427 = vld [vmem:[%s300] sm:$0xff]
        %v428 = vld [vmem:[%s300 + $0x8] sm:$0xff]
        %v429 = vld [vmem:[%s300 + $0x10] sm:$0xff]
        %v430 = vld [vmem:[%s300 + $0x18] sm:$0xff]
        %v431 = vld [vmem:[%s300 + $0x20] sm:$0xff]
        %v432 = vld [vmem:[%s300 + $0x28] sm:$0xff]
        %v433 = vld [vmem:[%s300 + $0x30] sm:$0xff]
        %v434 = vld [vmem:[%s300 + $0x38] sm:$0xff]
        %v435 = vld [vmem:[%s300 + $0x40] sm:$0xff]
        %v436 = vld [vmem:[%s300 + $0x48] sm:$0xff]
        %v437 = vld [vmem:[%s300 + $0x50] sm:$0xff]
        %v438 = vld [vmem:[%s300 + $0x58] sm:$0xff]
        %vm439 = vcmask 523264
        %v441 = vsel %vm439, %v415, 0
        %v444 = vsel %vm439, %v427, 0
        %446 = vmatprep.subr.mxu0 0.0
        %447 = vmatpush1.xpose.msra.mxu0 %v444
        %448 = vmatprep.subr.mxu0 0.0
        %449 = vmatpush1.xpose.msra.mxu0 0.0
        %450 = vmatprep.subr.mxu0 0.0
        %451 = vmatpush1.xpose.msra.mxu0 0.0
        %452 = vmatprep.subr.mxu0 0.0
        %453 = vmatpush1.xpose.msra.mxu0 0.0
        %454 = vmatprep.subr.mxu0 0.0
        %455 = vmatpush1.xpose.msra.mxu0 0.0
        %456 = vmatprep.subr.mxu0 0.0
        %457 = vmatpush1.xpose.msra.mxu0 0.0
        %458 = vmatprep.subr.mxu0 0.0
        %459 = vmatpush1.xpose.msra.mxu0 0.0
        %460 = vmatprep.subr.mxu0 0.0
        %461 = vmatpush1.xpose.msra.mxu0 0.0
        %462 = vmatprep.subr.mxu0 0.0
        %463 = vmatpush1.xpose.msra.mxu0 0.0
        %464 = vmatprep.subr.mxu0 0.0
        %465 = vmatpush1.xpose.msra.mxu0 0.0
        %466 = vmatprep.subr.mxu0 0.0
        %467 = vmatpush1.xpose.msra.mxu0 0.0
        %468 = vmatprep.subr.mxu0 0.0
        %469 = vmatpush1.xpose.msra.mxu0 0.0
        %470 = vmatprep.subr.mxu0 0.0
        %471 = vmatpush1.xpose.msra.mxu0 0.0
        %472 = vmatprep.subr.mxu0 0.0
        %473 = vmatpush1.xpose.msra.mxu0 0.0
        %474 = vmatprep.subr.mxu0 0.0
        %475 = vmatpush1.xpose.msra.mxu0 0.0
        %476 = vmatprep.subr.mxu0 0.0
        %477 = vmatpush1.xpose.msra.mxu0 0.0
        %478 = vmatprep.subr.mxu0 0.0
        %479 = vmatpush1.xpose.msra.mxu0 0.0
        %480 = vmatprep.subr.mxu0 0.0
        %481 = vmatpush1.xpose.msra.mxu0 0.0
        %482 = vmatprep.subr.mxu0 0.0
        %483 = vmatpush1.xpose.msra.mxu0 0.0
        %484 = vmatprep.subr.mxu0 0.0
        %485 = vmatpush1.xpose.msra.mxu0 0.0
        %486 = vmatprep.subr.mxu0 0.0
        %487 = vmatpush1.xpose.msra.mxu0 0.0
        %488 = vmatprep.subr.mxu0 0.0
        %489 = vmatpush1.xpose.msra.mxu0 0.0
        %490 = vmatprep.subr.mxu0 0.0
        %491 = vmatpush1.xpose.msra.mxu0 0.0
        %492 = vmatprep.subr.mxu0 0.0
        %493 = vmatpush1.xpose.msra.mxu0 0.0
        %494 = vmatprep.subr.mxu0 0.0
        %495 = vmatpush1.xpose.msra.mxu0 0.0
        %496 = vmatprep.subr.mxu0 0.0
        %497 = vmatpush1.xpose.msra.mxu0 0.0
        %498 = vmatprep.subr.mxu0 0.0
        %499 = vmatpush1.xpose.msra.mxu0 0.0
        %500 = vmatprep.subr.mxu0 0.0
        %501 = vmatpush1.xpose.msra.mxu0 0.0
        %502 = vmatprep.subr.mxu0 0.0
        %503 = vmatpush1.xpose.msra.mxu0 0.0
        %504 = vmatprep.subr.mxu0 0.0
        %505 = vmatpush1.xpose.msra.mxu0 0.0
        %506 = vmatprep.subr.mxu0 0.0
        %507 = vmatpush1.xpose.msra.mxu0 0.0
        %508 = vmatprep.subr.mxu0 0.0
        %509 = vmatpush1.xpose.msra.mxu0 0.0
        %510 = vmatprep.mubr.f32.mxu0 0.0
        %511 = vmatmul.mubr.f32.gmra.mrb[0].mxu0 %v441
        %v512 = vpop.f32.mrb[0].mxu0
        %v513 = vadd.f32 0.0, %v512
        %v514 = vpop.f32.mrb[0].mxu0
        %515 = vdwg.mxu0
        %v517 = vsel %vm439, %v416, 0
        %v520 = vsel %vm439, %v428, 0
        %522 = vmatprep.subr.mxu0 0.0
        %523 = vmatpush1.xpose.msra.mxu0 %v520
        %524 = vmatprep.subr.mxu0 0.0
        %525 = vmatpush1.xpose.msra.mxu0 0.0
        %526 = vmatprep.subr.mxu0 0.0
        %527 = vmatpush1.xpose.msra.mxu0 0.0
        %528 = vmatprep.subr.mxu0 0.0
        %529 = vmatpush1.xpose.msra.mxu0 0.0
        %530 = vmatprep.subr.mxu0 0.0
        %531 = vmatpush1.xpose.msra.mxu0 0.0
        %532 = vmatprep.subr.mxu0 0.0
        %533 = vmatpush1.xpose.msra.mxu0 0.0
        %534 = vmatprep.subr.mxu0 0.0
        %535 = vmatpush1.xpose.msra.mxu0 0.0
        %536 = vmatprep.subr.mxu0 0.0
        %537 = vmatpush1.xpose.msra.mxu0 0.0
        %538 = vmatprep.subr.mxu0 0.0
        %539 = vmatpush1.xpose.msra.mxu0 0.0
        %540 = vmatprep.subr.mxu0 0.0
        %541 = vmatpush1.xpose.msra.mxu0 0.0
        %542 = vmatprep.subr.mxu0 0.0
        %543 = vmatpush1.xpose.msra.mxu0 0.0
        %544 = vmatprep.subr.mxu0 0.0
        %545 = vmatpush1.xpose.msra.mxu0 0.0
        %546 = vmatprep.subr.mxu0 0.0
        %547 = vmatpush1.xpose.msra.mxu0 0.0
        %548 = vmatprep.subr.mxu0 0.0
        %549 = vmatpush1.xpose.msra.mxu0 0.0
        %550 = vmatprep.subr.mxu0 0.0
        %551 = vmatpush1.xpose.msra.mxu0 0.0
        %552 = vmatprep.subr.mxu0 0.0
        %553 = vmatpush1.xpose.msra.mxu0 0.0
        %554 = vmatprep.subr.mxu0 0.0
        %555 = vmatpush1.xpose.msra.mxu0 0.0
        %556 = vmatprep.subr.mxu0 0.0
        %557 = vmatpush1.xpose.msra.mxu0 0.0
        %558 = vmatprep.subr.mxu0 0.0
        %559 = vmatpush1.xpose.msra.mxu0 0.0
        %560 = vmatprep.subr.mxu0 0.0
        %561 = vmatpush1.xpose.msra.mxu0 0.0
        %562 = vmatprep.subr.mxu0 0.0
        %563 = vmatpush1.xpose.msra.mxu0 0.0
        %564 = vmatprep.subr.mxu0 0.0
        %565 = vmatpush1.xpose.msra.mxu0 0.0
        %566 = vmatprep.subr.mxu0 0.0
        %567 = vmatpush1.xpose.msra.mxu0 0.0
        %568 = vmatprep.subr.mxu0 0.0
        %569 = vmatpush1.xpose.msra.mxu0 0.0
        %570 = vmatprep.subr.mxu0 0.0
        %571 = vmatpush1.xpose.msra.mxu0 0.0
        %572 = vmatprep.subr.mxu0 0.0
        %573 = vmatpush1.xpose.msra.mxu0 0.0
        %574 = vmatprep.subr.mxu0 0.0
        %575 = vmatpush1.xpose.msra.mxu0 0.0
        %576 = vmatprep.subr.mxu0 0.0
        %577 = vmatpush1.xpose.msra.mxu0 0.0
        %578 = vmatprep.subr.mxu0 0.0
        %579 = vmatpush1.xpose.msra.mxu0 0.0
        %580 = vmatprep.subr.mxu0 0.0
        %581 = vmatpush1.xpose.msra.mxu0 0.0
        %582 = vmatprep.subr.mxu0 0.0
        %583 = vmatpush1.xpose.msra.mxu0 0.0
        %584 = vmatprep.subr.mxu0 0.0
        %585 = vmatpush1.xpose.msra.mxu0 0.0
        %586 = vmatprep.mubr.f32.mxu0 0.0
        %587 = vmatmul.mubr.f32.gmra.mrb[0].mxu0 %v517
        %v588 = vpop.f32.mrb[0].mxu0
        %v589 = vadd.f32 0.0, %v588
        %v590 = vpop.f32.mrb[0].mxu0
        %591 = vdwg.mxu0
        %v593 = vsel %vm439, %v417, 0
        %v596 = vsel %vm439, %v429, 0
        %598 = vmatprep.subr.mxu0 0.0
        %599 = vmatpush1.xpose.msra.mxu0 %v596
        %600 = vmatprep.subr.mxu0 0.0
        %601 = vmatpush1.xpose.msra.mxu0 0.0
        %602 = vmatprep.subr.mxu0 0.0
        %603 = vmatpush1.xpose.msra.mxu0 0.0
        %604 = vmatprep.subr.mxu0 0.0
        %605 = vmatpush1.xpose.msra.mxu0 0.0
        %606 = vmatprep.subr.mxu0 0.0
        %607 = vmatpush1.xpose.msra.mxu0 0.0
        %608 = vmatprep.subr.mxu0 0.0
        %609 = vmatpush1.xpose.msra.mxu0 0.0
        %610 = vmatprep.subr.mxu0 0.0
        %611 = vmatpush1.xpose.msra.mxu0 0.0
        %612 = vmatprep.subr.mxu0 0.0
        %613 = vmatpush1.xpose.msra.mxu0 0.0
        %614 = vmatprep.subr.mxu0 0.0
        %615 = vmatpush1.xpose.msra.mxu0 0.0
        %616 = vmatprep.subr.mxu0 0.0
        %617 = vmatpush1.xpose.msra.mxu0 0.0
        %618 = vmatprep.subr.mxu0 0.0
        %619 = vmatpush1.xpose.msra.mxu0 0.0
        %620 = vmatprep.subr.mxu0 0.0
        %621 = vmatpush1.xpose.msra.mxu0 0.0
        %622 = vmatprep.subr.mxu0 0.0
        %623 = vmatpush1.xpose.msra.mxu0 0.0
        %624 = vmatprep.subr.mxu0 0.0
        %625 = vmatpush1.xpose.msra.mxu0 0.0
        %626 = vmatprep.subr.mxu0 0.0
        %627 = vmatpush1.xpose.msra.mxu0 0.0
        %628 = vmatprep.subr.mxu0 0.0
        %629 = vmatpush1.xpose.msra.mxu0 0.0
        %630 = vmatprep.subr.mxu0 0.0
        %631 = vmatpush1.xpose.msra.mxu0 0.0
        %632 = vmatprep.subr.mxu0 0.0
        %633 = vmatpush1.xpose.msra.mxu0 0.0
        %634 = vmatprep.subr.mxu0 0.0
        %635 = vmatpush1.xpose.msra.mxu0 0.0
        %636 = vmatprep.subr.mxu0 0.0
        %637 = vmatpush1.xpose.msra.mxu0 0.0
        %638 = vmatprep.subr.mxu0 0.0
        %639 = vmatpush1.xpose.msra.mxu0 0.0
        %640 = vmatprep.subr.mxu0 0.0
        %641 = vmatpush1.xpose.msra.mxu0 0.0
        %642 = vmatprep.subr.mxu0 0.0
        %643 = vmatpush1.xpose.msra.mxu0 0.0
        %644 = vmatprep.subr.mxu0 0.0
        %645 = vmatpush1.xpose.msra.mxu0 0.0
        %646 = vmatprep.subr.mxu0 0.0
        %647 = vmatpush1.xpose.msra.mxu0 0.0
        %648 = vmatprep.subr.mxu0 0.0
        %649 = vmatpush1.xpose.msra.mxu0 0.0
        %650 = vmatprep.subr.mxu0 0.0
        %651 = vmatpush1.xpose.msra.mxu0 0.0
        %652 = vmatprep.subr.mxu0 0.0
        %653 = vmatpush1.xpose.msra.mxu0 0.0
        %654 = vmatprep.subr.mxu0 0.0
        %655 = vmatpush1.xpose.msra.mxu0 0.0
        %656 = vmatprep.subr.mxu0 0.0
        %657 = vmatpush1.xpose.msra.mxu0 0.0
        %658 = vmatprep.subr.mxu0 0.0
        %659 = vmatpush1.xpose.msra.mxu0 0.0
        %660 = vmatprep.subr.mxu0 0.0
        %661 = vmatpush1.xpose.msra.mxu0 0.0
        %662 = vmatprep.mubr.f32.mxu0 0.0
        %663 = vmatmul.mubr.f32.gmra.mrb[0].mxu0 %v593
        %v664 = vpop.f32.mrb[0].mxu0
        %v665 = vadd.f32 0.0, %v664
        %v666 = vpop.f32.mrb[0].mxu0
        %667 = vdwg.mxu0
        %v669 = vsel %vm439, %v418, 0
        %v672 = vsel %vm439, %v430, 0
        %674 = vmatprep.subr.mxu0 0.0
        %675 = vmatpush1.xpose.msra.mxu0 %v672
        %676 = vmatprep.subr.mxu0 0.0
        %677 = vmatpush1.xpose.msra.mxu0 0.0
        %678 = vmatprep.subr.mxu0 0.0
        %679 = vmatpush1.xpose.msra.mxu0 0.0
        %680 = vmatprep.subr.mxu0 0.0
        %681 = vmatpush1.xpose.msra.mxu0 0.0
        %682 = vmatprep.subr.mxu0 0.0
        %683 = vmatpush1.xpose.msra.mxu0 0.0
        %684 = vmatprep.subr.mxu0 0.0
        %685 = vmatpush1.xpose.msra.mxu0 0.0
        %686 = vmatprep.subr.mxu0 0.0
        %687 = vmatpush1.xpose.msra.mxu0 0.0
        %688 = vmatprep.subr.mxu0 0.0
        %689 = vmatpush1.xpose.msra.mxu0 0.0
        %690 = vmatprep.subr.mxu0 0.0
        %691 = vmatpush1.xpose.msra.mxu0 0.0
        %692 = vmatprep.subr.mxu0 0.0
        %693 = vmatpush1.xpose.msra.mxu0 0.0
        %694 = vmatprep.subr.mxu0 0.0
        %695 = vmatpush1.xpose.msra.mxu0 0.0
        %696 = vmatprep.subr.mxu0 0.0
        %697 = vmatpush1.xpose.msra.mxu0 0.0
        %698 = vmatprep.subr.mxu0 0.0
        %699 = vmatpush1.xpose.msra.mxu0 0.0
        %700 = vmatprep.subr.mxu0 0.0
        %701 = vmatpush1.xpose.msra.mxu0 0.0
        %702 = vmatprep.subr.mxu0 0.0
        %703 = vmatpush1.xpose.msra.mxu0 0.0
        %704 = vmatprep.subr.mxu0 0.0
        %705 = vmatpush1.xpose.msra.mxu0 0.0
        %706 = vmatprep.subr.mxu0 0.0
        %707 = vmatpush1.xpose.msra.mxu0 0.0
        %708 = vmatprep.subr.mxu0 0.0
        %709 = vmatpush1.xpose.msra.mxu0 0.0
        %710 = vmatprep.subr.mxu0 0.0
        %711 = vmatpush1.xpose.msra.mxu0 0.0
        %712 = vmatprep.subr.mxu0 0.0
        %713 = vmatpush1.xpose.msra.mxu0 0.0
        %714 = vmatprep.subr.mxu0 0.0
        %715 = vmatpush1.xpose.msra.mxu0 0.0
        %716 = vmatprep.subr.mxu0 0.0
        %717 = vmatpush1.xpose.msra.mxu0 0.0
        %718 = vmatprep.subr.mxu0 0.0
        %719 = vmatpush1.xpose.msra.mxu0 0.0
        %720 = vmatprep.subr.mxu0 0.0
        %721 = vmatpush1.xpose.msra.mxu0 0.0
        %722 = vmatprep.subr.mxu0 0.0
        %723 = vmatpush1.xpose.msra.mxu0 0.0
        %724 = vmatprep.subr.mxu0 0.0
        %725 = vmatpush1.xpose.msra.mxu0 0.0
        %726 = vmatprep.subr.mxu0 0.0
        %727 = vmatpush1.xpose.msra.mxu0 0.0
        %728 = vmatprep.subr.mxu0 0.0
        %729 = vmatpush1.xpose.msra.mxu0 0.0
        %730 = vmatprep.subr.mxu0 0.0
        %731 = vmatpush1.xpose.msra.mxu0 0.0
        %732 = vmatprep.subr.mxu0 0.0
        %733 = vmatpush1.xpose.msra.mxu0 0.0
        %734 = vmatprep.subr.mxu0 0.0
        %735 = vmatpush1.xpose.msra.mxu0 0.0
        %736 = vmatprep.subr.mxu0 0.0
        %737 = vmatpush1.xpose.msra.mxu0 0.0
        %738 = vmatprep.mubr.f32.mxu0 0.0
        %739 = vmatmul.mubr.f32.gmra.mrb[0].mxu0 %v669
        %v740 = vpop.f32.mrb[0].mxu0
        %v741 = vadd.f32 0.0, %v740
        %v742 = vpop.f32.mrb[0].mxu0
        %743 = vdwg.mxu0
        %v745 = vsel %vm439, %v419, 0
        %v748 = vsel %vm439, %v431, 0
        %750 = vmatprep.subr.mxu0 0.0
        %751 = vmatpush1.xpose.msra.mxu0 %v748
        %752 = vmatprep.subr.mxu0 0.0
        %753 = vmatpush1.xpose.msra.mxu0 0.0
        %754 = vmatprep.subr.mxu0 0.0
        %755 = vmatpush1.xpose.msra.mxu0 0.0
        %756 = vmatprep.subr.mxu0 0.0
        %757 = vmatpush1.xpose.msra.mxu0 0.0
        %758 = vmatprep.subr.mxu0 0.0
        %759 = vmatpush1.xpose.msra.mxu0 0.0
        %760 = vmatprep.subr.mxu0 0.0
        %761 = vmatpush1.xpose.msra.mxu0 0.0
        %762 = vmatprep.subr.mxu0 0.0
        %763 = vmatpush1.xpose.msra.mxu0 0.0
        %764 = vmatprep.subr.mxu0 0.0
        %765 = vmatpush1.xpose.msra.mxu0 0.0
        %766 = vmatprep.subr.mxu0 0.0
        %767 = vmatpush1.xpose.msra.mxu0 0.0
        %768 = vmatprep.subr.mxu0 0.0
        %769 = vmatpush1.xpose.msra.mxu0 0.0
        %770 = vmatprep.subr.mxu0 0.0
        %771 = vmatpush1.xpose.msra.mxu0 0.0
        %772 = vmatprep.subr.mxu0 0.0
        %773 = vmatpush1.xpose.msra.mxu0 0.0
        %774 = vmatprep.subr.mxu0 0.0
        %775 = vmatpush1.xpose.msra.mxu0 0.0
        %776 = vmatprep.subr.mxu0 0.0
        %777 = vmatpush1.xpose.msra.mxu0 0.0
        %778 = vmatprep.subr.mxu0 0.0
        %779 = vmatpush1.xpose.msra.mxu0 0.0
        %780 = vmatprep.subr.mxu0 0.0
        %781 = vmatpush1.xpose.msra.mxu0 0.0
        %782 = vmatprep.subr.mxu0 0.0
        %783 = vmatpush1.xpose.msra.mxu0 0.0
        %784 = vmatprep.subr.mxu0 0.0
        %785 = vmatpush1.xpose.msra.mxu0 0.0
        %786 = vmatprep.subr.mxu0 0.0
        %787 = vmatpush1.xpose.msra.mxu0 0.0
        %788 = vmatprep.subr.mxu0 0.0
        %789 = vmatpush1.xpose.msra.mxu0 0.0
        %790 = vmatprep.subr.mxu0 0.0
        %791 = vmatpush1.xpose.msra.mxu0 0.0
        %792 = vmatprep.subr.mxu0 0.0
        %793 = vmatpush1.xpose.msra.mxu0 0.0
        %794 = vmatprep.subr.mxu0 0.0
        %795 = vmatpush1.xpose.msra.mxu0 0.0
        %796 = vmatprep.subr.mxu0 0.0
        %797 = vmatpush1.xpose.msra.mxu0 0.0
        %798 = vmatprep.subr.mxu0 0.0
        %799 = vmatpush1.xpose.msra.mxu0 0.0
        %800 = vmatprep.subr.mxu0 0.0
        %801 = vmatpush1.xpose.msra.mxu0 0.0
        %802 = vmatprep.subr.mxu0 0.0
        %803 = vmatpush1.xpose.msra.mxu0 0.0
        %804 = vmatprep.subr.mxu0 0.0
        %805 = vmatpush1.xpose.msra.mxu0 0.0
        %806 = vmatprep.subr.mxu0 0.0
        %807 = vmatpush1.xpose.msra.mxu0 0.0
        %808 = vmatprep.subr.mxu0 0.0
        %809 = vmatpush1.xpose.msra.mxu0 0.0
        %810 = vmatprep.subr.mxu0 0.0
        %811 = vmatpush1.xpose.msra.mxu0 0.0
        %812 = vmatprep.subr.mxu0 0.0
        %813 = vmatpush1.xpose.msra.mxu0 0.0
        %814 = vmatprep.mubr.f32.mxu0 0.0
        %815 = vmatmul.mubr.f32.gmra.mrb[0].mxu0 %v745
        %v816 = vpop.f32.mrb[0].mxu0
        %v817 = vadd.f32 0.0, %v816
        %v818 = vpop.f32.mrb[0].mxu0
        %819 = vdwg.mxu0
        %v821 = vsel %vm439, %v420, 0
        %v824 = vsel %vm439, %v432, 0
        %826 = vmatprep.subr.mxu0 0.0
        %827 = vmatpush1.xpose.msra.mxu0 %v824
        %828 = vmatprep.subr.mxu0 0.0
        %829 = vmatpush1.xpose.msra.mxu0 0.0
        %830 = vmatprep.subr.mxu0 0.0
        %831 = vmatpush1.xpose.msra.mxu0 0.0
        %832 = vmatprep.subr.mxu0 0.0
        %833 = vmatpush1.xpose.msra.mxu0 0.0
        %834 = vmatprep.subr.mxu0 0.0
        %835 = vmatpush1.xpose.msra.mxu0 0.0
        %836 = vmatprep.subr.mxu0 0.0
        %837 = vmatpush1.xpose.msra.mxu0 0.0
        %838 = vmatprep.subr.mxu0 0.0
        %839 = vmatpush1.xpose.msra.mxu0 0.0
        %840 = vmatprep.subr.mxu0 0.0
        %841 = vmatpush1.xpose.msra.mxu0 0.0
        %842 = vmatprep.subr.mxu0 0.0
        %843 = vmatpush1.xpose.msra.mxu0 0.0
        %844 = vmatprep.subr.mxu0 0.0
        %845 = vmatpush1.xpose.msra.mxu0 0.0
        %846 = vmatprep.subr.mxu0 0.0
        %847 = vmatpush1.xpose.msra.mxu0 0.0
        %848 = vmatprep.subr.mxu0 0.0
        %849 = vmatpush1.xpose.msra.mxu0 0.0
        %850 = vmatprep.subr.mxu0 0.0
        %851 = vmatpush1.xpose.msra.mxu0 0.0
        %852 = vmatprep.subr.mxu0 0.0
        %853 = vmatpush1.xpose.msra.mxu0 0.0
        %854 = vmatprep.subr.mxu0 0.0
        %855 = vmatpush1.xpose.msra.mxu0 0.0
        %856 = vmatprep.subr.mxu0 0.0
        %857 = vmatpush1.xpose.msra.mxu0 0.0
        %858 = vmatprep.subr.mxu0 0.0
        %859 = vmatpush1.xpose.msra.mxu0 0.0
        %860 = vmatprep.subr.mxu0 0.0
        %861 = vmatpush1.xpose.msra.mxu0 0.0
        %862 = vmatprep.subr.mxu0 0.0
        %863 = vmatpush1.xpose.msra.mxu0 0.0
        %864 = vmatprep.subr.mxu0 0.0
        %865 = vmatpush1.xpose.msra.mxu0 0.0
        %866 = vmatprep.subr.mxu0 0.0
        %867 = vmatpush1.xpose.msra.mxu0 0.0
        %868 = vmatprep.subr.mxu0 0.0
        %869 = vmatpush1.xpose.msra.mxu0 0.0
        %870 = vmatprep.subr.mxu0 0.0
        %871 = vmatpush1.xpose.msra.mxu0 0.0
        %872 = vmatprep.subr.mxu0 0.0
        %873 = vmatpush1.xpose.msra.mxu0 0.0
        %874 = vmatprep.subr.mxu0 0.0
        %875 = vmatpush1.xpose.msra.mxu0 0.0
        %876 = vmatprep.subr.mxu0 0.0
        %877 = vmatpush1.xpose.msra.mxu0 0.0
        %878 = vmatprep.subr.mxu0 0.0
        %879 = vmatpush1.xpose.msra.mxu0 0.0
        %880 = vmatprep.subr.mxu0 0.0
        %881 = vmatpush1.xpose.msra.mxu0 0.0
        %882 = vmatprep.subr.mxu0 0.0
        %883 = vmatpush1.xpose.msra.mxu0 0.0
        %884 = vmatprep.subr.mxu0 0.0
        %885 = vmatpush1.xpose.msra.mxu0 0.0
        %886 = vmatprep.subr.mxu0 0.0
        %887 = vmatpush1.xpose.msra.mxu0 0.0
        %888 = vmatprep.subr.mxu0 0.0
        %889 = vmatpush1.xpose.msra.mxu0 0.0
        %890 = vmatprep.mubr.f32.mxu0 0.0
        %891 = vmatmul.mubr.f32.gmra.mrb[0].mxu0 %v821
        %v892 = vpop.f32.mrb[0].mxu0
        %v893 = vadd.f32 0.0, %v892
        %v894 = vpop.f32.mrb[0].mxu0
        %895 = vdwg.mxu0
        %v897 = vsel %vm439, %v421, 0
        %v900 = vsel %vm439, %v433, 0
        %902 = vmatprep.subr.mxu0 0.0
        %903 = vmatpush1.xpose.msra.mxu0 %v900
        %904 = vmatprep.subr.mxu0 0.0
        %905 = vmatpush1.xpose.msra.mxu0 0.0
        %906 = vmatprep.subr.mxu0 0.0
        %907 = vmatpush1.xpose.msra.mxu0 0.0
        %908 = vmatprep.subr.mxu0 0.0
        %909 = vmatpush1.xpose.msra.mxu0 0.0
        %910 = vmatprep.subr.mxu0 0.0
        %911 = vmatpush1.xpose.msra.mxu0 0.0
        %912 = vmatprep.subr.mxu0 0.0
        %913 = vmatpush1.xpose.msra.mxu0 0.0
        %914 = vmatprep.subr.mxu0 0.0
        %915 = vmatpush1.xpose.msra.mxu0 0.0
        %916 = vmatprep.subr.mxu0 0.0
        %917 = vmatpush1.xpose.msra.mxu0 0.0
        %918 = vmatprep.subr.mxu0 0.0
        %919 = vmatpush1.xpose.msra.mxu0 0.0
        %920 = vmatprep.subr.mxu0 0.0
        %921 = vmatpush1.xpose.msra.mxu0 0.0
        %922 = vmatprep.subr.mxu0 0.0
        %923 = vmatpush1.xpose.msra.mxu0 0.0
        %924 = vmatprep.subr.mxu0 0.0
        %925 = vmatpush1.xpose.msra.mxu0 0.0
        %926 = vmatprep.subr.mxu0 0.0
        %927 = vmatpush1.xpose.msra.mxu0 0.0
        %928 = vmatprep.subr.mxu0 0.0
        %929 = vmatpush1.xpose.msra.mxu0 0.0
        %930 = vmatprep.subr.mxu0 0.0
        %931 = vmatpush1.xpose.msra.mxu0 0.0
        %932 = vmatprep.subr.mxu0 0.0
        %933 = vmatpush1.xpose.msra.mxu0 0.0
        %934 = vmatprep.subr.mxu0 0.0
        %935 = vmatpush1.xpose.msra.mxu0 0.0
        %936 = vmatprep.subr.mxu0 0.0
        %937 = vmatpush1.xpose.msra.mxu0 0.0
        %938 = vmatprep.subr.mxu0 0.0
        %939 = vmatpush1.xpose.msra.mxu0 0.0
        %940 = vmatprep.subr.mxu0 0.0
        %941 = vmatpush1.xpose.msra.mxu0 0.0
        %942 = vmatprep.subr.mxu0 0.0
        %943 = vmatpush1.xpose.msra.mxu0 0.0
        %944 = vmatprep.subr.mxu0 0.0
        %945 = vmatpush1.xpose.msra.mxu0 0.0
        %946 = vmatprep.subr.mxu0 0.0
        %947 = vmatpush1.xpose.msra.mxu0 0.0
        %948 = vmatprep.subr.mxu0 0.0
        %949 = vmatpush1.xpose.msra.mxu0 0.0
        %950 = vmatprep.subr.mxu0 0.0
        %951 = vmatpush1.xpose.msra.mxu0 0.0
        %952 = vmatprep.subr.mxu0 0.0
        %953 = vmatpush1.xpose.msra.mxu0 0.0
        %954 = vmatprep.subr.mxu0 0.0
        %955 = vmatpush1.xpose.msra.mxu0 0.0
        %956 = vmatprep.subr.mxu0 0.0
        %957 = vmatpush1.xpose.msra.mxu0 0.0
        %958 = vmatprep.subr.mxu0 0.0
        %959 = vmatpush1.xpose.msra.mxu0 0.0
        %960 = vmatprep.subr.mxu0 0.0
        %961 = vmatpush1.xpose.msra.mxu0 0.0
        %962 = vmatprep.subr.mxu0 0.0
        %963 = vmatpush1.xpose.msra.mxu0 0.0
        %964 = vmatprep.subr.mxu0 0.0
        %965 = vmatpush1.xpose.msra.mxu0 0.0
        %966 = vmatprep.mubr.f32.mxu0 0.0
        %967 = vmatmul.mubr.f32.gmra.mrb[0].mxu0 %v897
        %v968 = vpop.f32.mrb[0].mxu0
        %v969 = vadd.f32 0.0, %v968
        %v970 = vpop.f32.mrb[0].mxu0
        %971 = vdwg.mxu0
        %v973 = vsel %vm439, %v422, 0
        %v976 = vsel %vm439, %v434, 0
        %978 = vmatprep.subr.mxu0 0.0
        %979 = vmatpush1.xpose.msra.mxu0 %v976
        %980 = vmatprep.subr.mxu0 0.0
        %981 = vmatpush1.xpose.msra.mxu0 0.0
        %982 = vmatprep.subr.mxu0 0.0
        %983 = vmatpush1.xpose.msra.mxu0 0.0
        %984 = vmatprep.subr.mxu0 0.0
        %985 = vmatpush1.xpose.msra.mxu0 0.0
        %986 = vmatprep.subr.mxu0 0.0
        %987 = vmatpush1.xpose.msra.mxu0 0.0
        %988 = vmatprep.subr.mxu0 0.0
        %989 = vmatpush1.xpose.msra.mxu0 0.0
        %990 = vmatprep.subr.mxu0 0.0
        %991 = vmatpush1.xpose.msra.mxu0 0.0
        %992 = vmatprep.subr.mxu0 0.0
        %993 = vmatpush1.xpose.msra.mxu0 0.0
        %994 = vmatprep.subr.mxu0 0.0
        %995 = vmatpush1.xpose.msra.mxu0 0.0
        %996 = vmatprep.subr.mxu0 0.0
        %997 = vmatpush1.xpose.msra.mxu0 0.0
        %998 = vmatprep.subr.mxu0 0.0
        %999 = vmatpush1.xpose.msra.mxu0 0.0
        %1000 = vmatprep.subr.mxu0 0.0
        %1001 = vmatpush1.xpose.msra.mxu0 0.0
        %1002 = vmatprep.subr.mxu0 0.0
        %1003 = vmatpush1.xpose.msra.mxu0 0.0
        %1004 = vmatprep.subr.mxu0 0.0
        %1005 = vmatpush1.xpose.msra.mxu0 0.0
        %1006 = vmatprep.subr.mxu0 0.0
        %1007 = vmatpush1.xpose.msra.mxu0 0.0
        %1008 = vmatprep.subr.mxu0 0.0
        %1009 = vmatpush1.xpose.msra.mxu0 0.0
        %1010 = vmatprep.subr.mxu0 0.0
        %1011 = vmatpush1.xpose.msra.mxu0 0.0
        %1012 = vmatprep.subr.mxu0 0.0
        %1013 = vmatpush1.xpose.msra.mxu0 0.0
        %1014 = vmatprep.subr.mxu0 0.0
        %1015 = vmatpush1.xpose.msra.mxu0 0.0
        %1016 = vmatprep.subr.mxu0 0.0
        %1017 = vmatpush1.xpose.msra.mxu0 0.0
        %1018 = vmatprep.subr.mxu0 0.0
        %1019 = vmatpush1.xpose.msra.mxu0 0.0
        %1020 = vmatprep.subr.mxu0 0.0
        %1021 = vmatpush1.xpose.msra.mxu0 0.0
        %1022 = vmatprep.subr.mxu0 0.0
        %1023 = vmatpush1.xpose.msra.mxu0 0.0
        %1024 = vmatprep.subr.mxu0 0.0
        %1025 = vmatpush1.xpose.msra.mxu0 0.0
        %1026 = vmatprep.subr.mxu0 0.0
        %1027 = vmatpush1.xpose.msra.mxu0 0.0
        %1028 = vmatprep.subr.mxu0 0.0
        %1029 = vmatpush1.xpose.msra.mxu0 0.0
        %1030 = vmatprep.subr.mxu0 0.0
        %1031 = vmatpush1.xpose.msra.mxu0 0.0
        %1032 = vmatprep.subr.mxu0 0.0
        %1033 = vmatpush1.xpose.msra.mxu0 0.0
        %1034 = vmatprep.subr.mxu0 0.0
        %1035 = vmatpush1.xpose.msra.mxu0 0.0
        %1036 = vmatprep.subr.mxu0 0.0
        %1037 = vmatpush1.xpose.msra.mxu0 0.0
        %1038 = vmatprep.subr.mxu0 0.0
        %1039 = vmatpush1.xpose.msra.mxu0 0.0
        %1040 = vmatprep.subr.mxu0 0.0
        %1041 = vmatpush1.xpose.msra.mxu0 0.0
        %1042 = vmatprep.mubr.f32.mxu0 0.0
        %1043 = vmatmul.mubr.f32.gmra.mrb[0].mxu0 %v973
        %v1044 = vpop.f32.mrb[0].mxu0
        %v1045 = vadd.f32 0.0, %v1044
        %v1046 = vpop.f32.mrb[0].mxu0
        %1047 = vdwg.mxu0
        %v1049 = vsel %vm439, %v423, 0
        %v1052 = vsel %vm439, %v435, 0
        %1054 = vmatprep.subr.mxu0 0.0
        %1055 = vmatpush1.xpose.msra.mxu0 %v1052
        %1056 = vmatprep.subr.mxu0 0.0
        %1057 = vmatpush1.xpose.msra.mxu0 0.0
        %1058 = vmatprep.subr.mxu0 0.0
        %1059 = vmatpush1.xpose.msra.mxu0 0.0
        %1060 = vmatprep.subr.mxu0 0.0
        %1061 = vmatpush1.xpose.msra.mxu0 0.0
        %1062 = vmatprep.subr.mxu0 0.0
        %1063 = vmatpush1.xpose.msra.mxu0 0.0
        %1064 = vmatprep.subr.mxu0 0.0
        %1065 = vmatpush1.xpose.msra.mxu0 0.0
        %1066 = vmatprep.subr.mxu0 0.0
        %1067 = vmatpush1.xpose.msra.mxu0 0.0
        %1068 = vmatprep.subr.mxu0 0.0
        %1069 = vmatpush1.xpose.msra.mxu0 0.0
        %1070 = vmatprep.subr.mxu0 0.0
        %1071 = vmatpush1.xpose.msra.mxu0 0.0
        %1072 = vmatprep.subr.mxu0 0.0
        %1073 = vmatpush1.xpose.msra.mxu0 0.0
        %1074 = vmatprep.subr.mxu0 0.0
        %1075 = vmatpush1.xpose.msra.mxu0 0.0
        %1076 = vmatprep.subr.mxu0 0.0
        %1077 = vmatpush1.xpose.msra.mxu0 0.0
        %1078 = vmatprep.subr.mxu0 0.0
        %1079 = vmatpush1.xpose.msra.mxu0 0.0
        %1080 = vmatprep.subr.mxu0 0.0
        %1081 = vmatpush1.xpose.msra.mxu0 0.0
        %1082 = vmatprep.subr.mxu0 0.0
        %1083 = vmatpush1.xpose.msra.mxu0 0.0
        %1084 = vmatprep.subr.mxu0 0.0
        %1085 = vmatpush1.xpose.msra.mxu0 0.0
        %1086 = vmatprep.subr.mxu0 0.0
        %1087 = vmatpush1.xpose.msra.mxu0 0.0
        %1088 = vmatprep.subr.mxu0 0.0
        %1089 = vmatpush1.xpose.msra.mxu0 0.0
        %1090 = vmatprep.subr.mxu0 0.0
        %1091 = vmatpush1.xpose.msra.mxu0 0.0
        %1092 = vmatprep.subr.mxu0 0.0
        %1093 = vmatpush1.xpose.msra.mxu0 0.0
        %1094 = vmatprep.subr.mxu0 0.0
        %1095 = vmatpush1.xpose.msra.mxu0 0.0
        %1096 = vmatprep.subr.mxu0 0.0
        %1097 = vmatpush1.xpose.msra.mxu0 0.0
        %1098 = vmatprep.subr.mxu0 0.0
        %1099 = vmatpush1.xpose.msra.mxu0 0.0
        %1100 = vmatprep.subr.mxu0 0.0
        %1101 = vmatpush1.xpose.msra.mxu0 0.0
        %1102 = vmatprep.subr.mxu0 0.0
        %1103 = vmatpush1.xpose.msra.mxu0 0.0
        %1104 = vmatprep.subr.mxu0 0.0
        %1105 = vmatpush1.xpose.msra.mxu0 0.0
        %1106 = vmatprep.subr.mxu0 0.0
        %1107 = vmatpush1.xpose.msra.mxu0 0.0
        %1108 = vmatprep.subr.mxu0 0.0
        %1109 = vmatpush1.xpose.msra.mxu0 0.0
        %1110 = vmatprep.subr.mxu0 0.0
        %1111 = vmatpush1.xpose.msra.mxu0 0.0
        %1112 = vmatprep.subr.mxu0 0.0
        %1113 = vmatpush1.xpose.msra.mxu0 0.0
        %1114 = vmatprep.subr.mxu0 0.0
        %1115 = vmatpush1.xpose.msra.mxu0 0.0
        %1116 = vmatprep.subr.mxu0 0.0
        %1117 = vmatpush1.xpose.msra.mxu0 0.0
        %1118 = vmatprep.mubr.f32.mxu0 0.0
        %1119 = vmatmul.mubr.f32.gmra.mrb[0].mxu0 %v1049
        %v1120 = vpop.f32.mrb[0].mxu0
        %v1121 = vadd.f32 0.0, %v1120
        %v1122 = vpop.f32.mrb[0].mxu0
        %1123 = vdwg.mxu0
        %v1125 = vsel %vm439, %v424, 0
        %v1128 = vsel %vm439, %v436, 0
        %1130 = vmatprep.subr.mxu0 0.0
        %1131 = vmatpush1.xpose.msra.mxu0 %v1128
        %1132 = vmatprep.subr.mxu0 0.0
        %1133 = vmatpush1.xpose.msra.mxu0 0.0
        %1134 = vmatprep.subr.mxu0 0.0
        %1135 = vmatpush1.xpose.msra.mxu0 0.0
        %1136 = vmatprep.subr.mxu0 0.0
        %1137 = vmatpush1.xpose.msra.mxu0 0.0
        %1138 = vmatprep.subr.mxu0 0.0
        %1139 = vmatpush1.xpose.msra.mxu0 0.0
        %1140 = vmatprep.subr.mxu0 0.0
        %1141 = vmatpush1.xpose.msra.mxu0 0.0
        %1142 = vmatprep.subr.mxu0 0.0
        %1143 = vmatpush1.xpose.msra.mxu0 0.0
        %1144 = vmatprep.subr.mxu0 0.0
        %1145 = vmatpush1.xpose.msra.mxu0 0.0
        %1146 = vmatprep.subr.mxu0 0.0
        %1147 = vmatpush1.xpose.msra.mxu0 0.0
        %1148 = vmatprep.subr.mxu0 0.0
        %1149 = vmatpush1.xpose.msra.mxu0 0.0
        %1150 = vmatprep.subr.mxu0 0.0
        %1151 = vmatpush1.xpose.msra.mxu0 0.0
        %1152 = vmatprep.subr.mxu0 0.0
        %1153 = vmatpush1.xpose.msra.mxu0 0.0
        %1154 = vmatprep.subr.mxu0 0.0
        %1155 = vmatpush1.xpose.msra.mxu0 0.0
        %1156 = vmatprep.subr.mxu0 0.0
        %1157 = vmatpush1.xpose.msra.mxu0 0.0
        %1158 = vmatprep.subr.mxu0 0.0
        %1159 = vmatpush1.xpose.msra.mxu0 0.0
        %1160 = vmatprep.subr.mxu0 0.0
        %1161 = vmatpush1.xpose.msra.mxu0 0.0
        %1162 = vmatprep.subr.mxu0 0.0
        %1163 = vmatpush1.xpose.msra.mxu0 0.0
        %1164 = vmatprep.subr.mxu0 0.0
        %1165 = vmatpush1.xpose.msra.mxu0 0.0
        %1166 = vmatprep.subr.mxu0 0.0
        %1167 = vmatpush1.xpose.msra.mxu0 0.0
        %1168 = vmatprep.subr.mxu0 0.0
        %1169 = vmatpush1.xpose.msra.mxu0 0.0
        %1170 = vmatprep.subr.mxu0 0.0
        %1171 = vmatpush1.xpose.msra.mxu0 0.0
        %1172 = vmatprep.subr.mxu0 0.0
        %1173 = vmatpush1.xpose.msra.mxu0 0.0
        %1174 = vmatprep.subr.mxu0 0.0
        %1175 = vmatpush1.xpose.msra.mxu0 0.0
        %1176 = vmatprep.subr.mxu0 0.0
        %1177 = vmatpush1.xpose.msra.mxu0 0.0
        %1178 = vmatprep.subr.mxu0 0.0
        %1179 = vmatpush1.xpose.msra.mxu0 0.0
        %1180 = vmatprep.subr.mxu0 0.0
        %1181 = vmatpush1.xpose.msra.mxu0 0.0
        %1182 = vmatprep.subr.mxu0 0.0
        %1183 = vmatpush1.xpose.msra.mxu0 0.0
        %1184 = vmatprep.subr.mxu0 0.0
        %1185 = vmatpush1.xpose.msra.mxu0 0.0
        %1186 = vmatprep.subr.mxu0 0.0
        %1187 = vmatpush1.xpose.msra.mxu0 0.0
        %1188 = vmatprep.subr.mxu0 0.0
        %1189 = vmatpush1.xpose.msra.mxu0 0.0
        %1190 = vmatprep.subr.mxu0 0.0
        %1191 = vmatpush1.xpose.msra.mxu0 0.0
        %1192 = vmatprep.subr.mxu0 0.0
        %1193 = vmatpush1.xpose.msra.mxu0 0.0
        %1194 = vmatprep.mubr.f32.mxu0 0.0
        %1195 = vmatmul.mubr.f32.gmra.mrb[0].mxu0 %v1125
        %v1196 = vpop.f32.mrb[0].mxu0
        %v1197 = vadd.f32 0.0, %v1196
        %v1198 = vpop.f32.mrb[0].mxu0
        %1199 = vdwg.mxu0
        %v1201 = vsel %vm439, %v425, 0
        %v1204 = vsel %vm439, %v437, 0
        %1206 = vmatprep.subr.mxu0 0.0
        %1207 = vmatpush1.xpose.msra.mxu0 %v1204
        %1208 = vmatprep.subr.mxu0 0.0
        %1209 = vmatpush1.xpose.msra.mxu0 0.0
        %1210 = vmatprep.subr.mxu0 0.0
        %1211 = vmatpush1.xpose.msra.mxu0 0.0
        %1212 = vmatprep.subr.mxu0 0.0
        %1213 = vmatpush1.xpose.msra.mxu0 0.0
        %1214 = vmatprep.subr.mxu0 0.0
        %1215 = vmatpush1.xpose.msra.mxu0 0.0
        %1216 = vmatprep.subr.mxu0 0.0
        %1217 = vmatpush1.xpose.msra.mxu0 0.0
        %1218 = vmatprep.subr.mxu0 0.0
        %1219 = vmatpush1.xpose.msra.mxu0 0.0
        %1220 = vmatprep.subr.mxu0 0.0
        %1221 = vmatpush1.xpose.msra.mxu0 0.0
        %1222 = vmatprep.subr.mxu0 0.0
        %1223 = vmatpush1.xpose.msra.mxu0 0.0
        %1224 = vmatprep.subr.mxu0 0.0
        %1225 = vmatpush1.xpose.msra.mxu0 0.0
        %1226 = vmatprep.subr.mxu0 0.0
        %1227 = vmatpush1.xpose.msra.mxu0 0.0
        %1228 = vmatprep.subr.mxu0 0.0
        %1229 = vmatpush1.xpose.msra.mxu0 0.0
        %1230 = vmatprep.subr.mxu0 0.0
        %1231 = vmatpush1.xpose.msra.mxu0 0.0
        %1232 = vmatprep.subr.mxu0 0.0
        %1233 = vmatpush1.xpose.msra.mxu0 0.0
        %1234 = vmatprep.subr.mxu0 0.0
        %1235 = vmatpush1.xpose.msra.mxu0 0.0
        %1236 = vmatprep.subr.mxu0 0.0
        %1237 = vmatpush1.xpose.msra.mxu0 0.0
        %1238 = vmatprep.subr.mxu0 0.0
        %1239 = vmatpush1.xpose.msra.mxu0 0.0
        %1240 = vmatprep.subr.mxu0 0.0
        %1241 = vmatpush1.xpose.msra.mxu0 0.0
        %1242 = vmatprep.subr.mxu0 0.0
        %1243 = vmatpush1.xpose.msra.mxu0 0.0
        %1244 = vmatprep.subr.mxu0 0.0
        %1245 = vmatpush1.xpose.msra.mxu0 0.0
        %1246 = vmatprep.subr.mxu0 0.0
        %1247 = vmatpush1.xpose.msra.mxu0 0.0
        %1248 = vmatprep.subr.mxu0 0.0
        %1249 = vmatpush1.xpose.msra.mxu0 0.0
        %1250 = vmatprep.subr.mxu0 0.0
        %1251 = vmatpush1.xpose.msra.mxu0 0.0
        %1252 = vmatprep.subr.mxu0 0.0
        %1253 = vmatpush1.xpose.msra.mxu0 0.0
        %1254 = vmatprep.subr.mxu0 0.0
        %1255 = vmatpush1.xpose.msra.mxu0 0.0
        %1256 = vmatprep.subr.mxu0 0.0
        %1257 = vmatpush1.xpose.msra.mxu0 0.0
        %1258 = vmatprep.subr.mxu0 0.0
        %1259 = vmatpush1.xpose.msra.mxu0 0.0
        %1260 = vmatprep.subr.mxu0 0.0
        %1261 = vmatpush1.xpose.msra.mxu0 0.0
        %1262 = vmatprep.subr.mxu0 0.0
        %1263 = vmatpush1.xpose.msra.mxu0 0.0
        %1264 = vmatprep.subr.mxu0 0.0
        %1265 = vmatpush1.xpose.msra.mxu0 0.0
        %1266 = vmatprep.subr.mxu0 0.0
        %1267 = vmatpush1.xpose.msra.mxu0 0.0
        %1268 = vmatprep.subr.mxu0 0.0
        %1269 = vmatpush1.xpose.msra.mxu0 0.0
        %1270 = vmatprep.mubr.f32.mxu0 0.0
        %1271 = vmatmul.mubr.f32.gmra.mrb[0].mxu0 %v1201
        %v1272 = vpop.f32.mrb[0].mxu0
        %v1273 = vadd.f32 0.0, %v1272
        %v1274 = vpop.f32.mrb[0].mxu0
        %1275 = vdwg.mxu0
        %v1277 = vsel %vm439, %v426, 0
        %v1280 = vsel %vm439, %v438, 0
        %1282 = vmatprep.subr.mxu0 0.0
        %1283 = vmatpush1.xpose.msra.mxu0 %v1280
        %1284 = vmatprep.subr.mxu0 0.0
        %1285 = vmatpush1.xpose.msra.mxu0 0.0
        %1286 = vmatprep.subr.mxu0 0.0
        %1287 = vmatpush1.xpose.msra.mxu0 0.0
        %1288 = vmatprep.subr.mxu0 0.0
        %1289 = vmatpush1.xpose.msra.mxu0 0.0
        %1290 = vmatprep.subr.mxu0 0.0
        %1291 = vmatpush1.xpose.msra.mxu0 0.0
        %1292 = vmatprep.subr.mxu0 0.0
        %1293 = vmatpush1.xpose.msra.mxu0 0.0
        %1294 = vmatprep.subr.mxu0 0.0
        %1295 = vmatpush1.xpose.msra.mxu0 0.0
        %1296 = vmatprep.subr.mxu0 0.0
        %1297 = vmatpush1.xpose.msra.mxu0 0.0
        %1298 = vmatprep.subr.mxu0 0.0
        %1299 = vmatpush1.xpose.msra.mxu0 0.0
        %1300 = vmatprep.subr.mxu0 0.0
        %1301 = vmatpush1.xpose.msra.mxu0 0.0
        %1302 = vmatprep.subr.mxu0 0.0
        %1303 = vmatpush1.xpose.msra.mxu0 0.0
        %1304 = vmatprep.subr.mxu0 0.0
        %1305 = vmatpush1.xpose.msra.mxu0 0.0
        %1306 = vmatprep.subr.mxu0 0.0
        %1307 = vmatpush1.xpose.msra.mxu0 0.0
        %1308 = vmatprep.subr.mxu0 0.0
        %1309 = vmatpush1.xpose.msra.mxu0 0.0
        %1310 = vmatprep.subr.mxu0 0.0
        %1311 = vmatpush1.xpose.msra.mxu0 0.0
        %1312 = vmatprep.subr.mxu0 0.0
        %1313 = vmatpush1.xpose.msra.mxu0 0.0
        %1314 = vmatprep.subr.mxu0 0.0
        %1315 = vmatpush1.xpose.msra.mxu0 0.0
        %1316 = vmatprep.subr.mxu0 0.0
        %1317 = vmatpush1.xpose.msra.mxu0 0.0
        %1318 = vmatprep.subr.mxu0 0.0
        %1319 = vmatpush1.xpose.msra.mxu0 0.0
        %1320 = vmatprep.subr.mxu0 0.0
        %1321 = vmatpush1.xpose.msra.mxu0 0.0
        %1322 = vmatprep.subr.mxu0 0.0
        %1323 = vmatpush1.xpose.msra.mxu0 0.0
        %1324 = vmatprep.subr.mxu0 0.0
        %1325 = vmatpush1.xpose.msra.mxu0 0.0
        %1326 = vmatprep.subr.mxu0 0.0
        %1327 = vmatpush1.xpose.msra.mxu0 0.0
        %1328 = vmatprep.subr.mxu0 0.0
        %1329 = vmatpush1.xpose.msra.mxu0 0.0
        %1330 = vmatprep.subr.mxu0 0.0
        %1331 = vmatpush1.xpose.msra.mxu0 0.0
        %1332 = vmatprep.subr.mxu0 0.0
        %1333 = vmatpush1.xpose.msra.mxu0 0.0
        %1334 = vmatprep.subr.mxu0 0.0
        %1335 = vmatpush1.xpose.msra.mxu0 0.0
        %1336 = vmatprep.subr.mxu0 0.0
        %1337 = vmatpush1.xpose.msra.mxu0 0.0
        %1338 = vmatprep.subr.mxu0 0.0
        %1339 = vmatpush1.xpose.msra.mxu0 0.0
        %1340 = vmatprep.subr.mxu0 0.0
        %1341 = vmatpush1.xpose.msra.mxu0 0.0
        %1342 = vmatprep.subr.mxu0 0.0
        %1343 = vmatpush1.xpose.msra.mxu0 0.0
        %1344 = vmatprep.subr.mxu0 0.0
        %1345 = vmatpush1.xpose.msra.mxu0 0.0
        %1346 = vmatprep.mubr.f32.mxu0 0.0
        %1347 = vmatmul.mubr.f32.gmra.mrb[0].mxu0 %v1277
        %v1348 = vpop.f32.mrb[0].mxu0
        %v1349 = vadd.f32 0.0, %v1348
        %v1350 = vpop.f32.mrb[0].mxu0
        %1351 = vdwg.mxu0
        %v1352 = vmul.f32 %v513, 0.125
        %v1353 = vmul.f32 %v589, 0.125
        %v1354 = vmul.f32 %v665, 0.125
        %v1355 = vmul.f32 %v741, 0.125
        %v1356 = vmul.f32 %v817, 0.125
        %v1357 = vmul.f32 %v893, 0.125
        %v1358 = vmul.f32 %v969, 0.125
        %v1359 = vmul.f32 %v1045, 0.125
        %v1360 = vmul.f32 %v1121, 0.125
        %v1361 = vmul.f32 %v1197, 0.125
        %v1362 = vmul.f32 %v1273, 0.125
        %v1363 = vmul.f32 %v1349, 0.125
        %v1364 = vld [vmem:[%s368] sm:$0x3]
        %v1365 = vld [vmem:[%s368 + $0x2] sm:$0x3]
        %v1366 = vld [vmem:[%s368 + $0x4] sm:$0x3]
        %v1367 = vld [vmem:[%s368 + $0x6] sm:$0x3]
        %v1368 = vld [vmem:[%s368 + $0x8] sm:$0x3]
        %v1369 = vld [vmem:[%s368 + $0xa] sm:$0x3]
        %v1370 = vld [vmem:[%s368 + $0xc] sm:$0x3]
        %v1371 = vld [vmem:[%s368 + $0xe] sm:$0x3]
        %v1372 = vld [vmem:[%s368 + $0x10] sm:$0x3]
        %v1373 = vld [vmem:[%s368 + $0x12] sm:$0x3]
        %v1374 = vld [vmem:[%s368 + $0x14] sm:$0x3]
        %v1375 = vld [vmem:[%s368 + $0x16] sm:$0x3]
        %vm1376 = vnez %v1364
        %vm1377 = vnez %v1365
        %vm1378 = vnez %v1366
        %vm1379 = vnez %v1367
        %vm1380 = vnez %v1368
        %vm1381 = vnez %v1369
        %vm1382 = vnez %v1370
        %vm1383 = vnez %v1371
        %vm1384 = vnez %v1372
        %vm1385 = vnez %v1373
        %vm1386 = vnez %v1374
        %vm1387 = vnez %v1375
        %v1388 = vsel %vm1376, 16843009, 0
        %v1389 = vsel %vm1377, 16843009, 0
        %v1390 = vsel %vm1378, 16843009, 0
        %v1391 = vsel %vm1379, 16843009, 0
        %v1392 = vsel %vm1380, 16843009, 0
        %v1393 = vsel %vm1381, 16843009, 0
        %v1394 = vsel %vm1382, 16843009, 0
        %v1395 = vsel %vm1383, 16843009, 0
        %v1396 = vsel %vm1384, 16843009, 0
        %v1397 = vsel %vm1385, 16843009, 0
        %v1398 = vsel %vm1386, 16843009, 0
        %v1399 = vsel %vm1387, 16843009, 0
        %v1400 = vunpack.c.0.s8 %v1388
        %v1401 = vunpack.c.0.s8 %v1389
        %v1402 = vunpack.c.0.s8 %v1390
        %v1403 = vunpack.c.0.s8 %v1391
        %v1404 = vunpack.c.0.s8 %v1392
        %v1405 = vunpack.c.0.s8 %v1393
        %v1406 = vunpack.c.0.s8 %v1394
        %v1407 = vunpack.c.0.s8 %v1395
        %v1408 = vunpack.c.0.s8 %v1396
        %v1409 = vunpack.c.0.s8 %v1397
        %v1410 = vunpack.c.0.s8 %v1398
        %v1411 = vunpack.c.0.s8 %v1399
        %vm1412 = vcmp.ne.s32.totalorder %v1400, 0
        %vm1413 = vcmp.ne.s32.totalorder %v1401, 0
        %vm1414 = vcmp.ne.s32.totalorder %v1402, 0
        %vm1415 = vcmp.ne.s32.totalorder %v1403, 0
        %vm1416 = vcmp.ne.s32.totalorder %v1404, 0
        %vm1417 = vcmp.ne.s32.totalorder %v1405, 0
        %vm1418 = vcmp.ne.s32.totalorder %v1406, 0
        %vm1419 = vcmp.ne.s32.totalorder %v1407, 0
        %vm1420 = vcmp.ne.s32.totalorder %v1408, 0
        %vm1421 = vcmp.ne.s32.totalorder %v1409, 0
        %vm1422 = vcmp.ne.s32.totalorder %v1410, 0
        %vm1423 = vcmp.ne.s32.totalorder %v1411, 0
        %v1424 = vsel %vm1412, -1e+09, %v1352
        %v1425 = vsel %vm1413, -1e+09, %v1353
        %v1426 = vsel %vm1414, -1e+09, %v1354
        %v1427 = vsel %vm1415, -1e+09, %v1355
        %v1428 = vsel %vm1416, -1e+09, %v1356
        %v1429 = vsel %vm1417, -1e+09, %v1357
        %v1430 = vsel %vm1418, -1e+09, %v1358
        %v1431 = vsel %vm1419, -1e+09, %v1359
        %v1432 = vsel %vm1420, -1e+09, %v1360
        %v1433 = vsel %vm1421, -1e+09, %v1361
        %v1434 = vsel %vm1422, -1e+09, %v1362
        %v1435 = vsel %vm1423, -1e+09, %v1363
        %v1436 = vld [vmem:[#allocation2] sm:$0xff]
        %v1437 = vld [vmem:[#allocation2 + $0x8] sm:$0xff]
        %v1438 = vld [vmem:[#allocation2 + $0x10] sm:$0xff]
        %v1439 = vld [vmem:[#allocation2 + $0x18] sm:$0xff]
        %v1440 = vld [vmem:[#allocation2 + $0x20] sm:$0xff]
        %v1441 = vld [vmem:[#allocation2 + $0x28] sm:$0xff]
        %v1442 = vld [vmem:[#allocation2 + $0x30] sm:$0xff]
        %v1443 = vld [vmem:[#allocation2 + $0x38] sm:$0xff]
        %v1444 = vld [vmem:[#allocation2 + $0x40] sm:$0xff]
        %v1445 = vld [vmem:[#allocation2 + $0x48] sm:$0xff]
        %v1446 = vld [vmem:[#allocation2 + $0x50] sm:$0xff]
        %v1447 = vld [vmem:[#allocation2 + $0x58] sm:$0xff]
        %vm1448 = vcmask 64512
        %v1449 = vsel %vm1448, %v1424, -inf
        %1450 = vmax.xlane.f32.xlu0 %v1449
        %v1451 = vpop.xlane.xlu0 %1450
        %v1452 = vsel %vm1448, %v1425, -inf
        %1453 = vmax.xlane.f32.xlu0 %v1452
        %v1454 = vpop.xlane.xlu0 %1453
        %v1455 = vsel %vm1448, %v1426, -inf
        %1456 = vmax.xlane.f32.xlu0 %v1455
        %v1457 = vpop.xlane.xlu0 %1456
        %v1458 = vsel %vm1448, %v1427, -inf
        %1459 = vmax.xlane.f32.xlu0 %v1458
        %v1460 = vpop.xlane.xlu0 %1459
        %v1461 = vsel %vm1448, %v1428, -inf
        %1462 = vmax.xlane.f32.xlu0 %v1461
        %v1463 = vpop.xlane.xlu0 %1462
        %v1464 = vsel %vm1448, %v1429, -inf
        %1465 = vmax.xlane.f32.xlu0 %v1464
        %v1466 = vpop.xlane.xlu0 %1465
        %v1467 = vsel %vm1448, %v1430, -inf
        %1468 = vmax.xlane.f32.xlu0 %v1467
        %v1469 = vpop.xlane.xlu0 %1468
        %v1470 = vsel %vm1448, %v1431, -inf
        %1471 = vmax.xlane.f32.xlu0 %v1470
        %v1472 = vpop.xlane.xlu0 %1471
        %v1473 = vsel %vm1448, %v1432, -inf
        %1474 = vmax.xlane.f32.xlu0 %v1473
        %v1475 = vpop.xlane.xlu0 %1474
        %v1476 = vsel %vm1448, %v1433, -inf
        %1477 = vmax.xlane.f32.xlu0 %v1476
        %v1478 = vpop.xlane.xlu0 %1477
        %v1479 = vsel %vm1448, %v1434, -inf
        %1480 = vmax.xlane.f32.xlu0 %v1479
        %v1481 = vpop.xlane.xlu0 %1480
        %v1482 = vsel %vm1448, %v1435, -inf
        %1483 = vmax.xlane.f32.xlu0 %v1482
        %v1484 = vpop.xlane.xlu0 %1483
        %v1485 = vmax.f32 %v1436, %v1451
        %v1486 = vmax.f32 %v1437, %v1454
        %v1487 = vmax.f32 %v1438, %v1457
        %v1488 = vmax.f32 %v1439, %v1460
        %v1489 = vmax.f32 %v1440, %v1463
        %v1490 = vmax.f32 %v1441, %v1466
        %v1491 = vmax.f32 %v1442, %v1469
        %v1492 = vmax.f32 %v1443, %v1472
        %v1493 = vmax.f32 %v1444, %v1475
        %v1494 = vmax.f32 %v1445, %v1478
        %v1495 = vmax.f32 %v1446, %v1481
        %v1496 = vmax.f32 %v1447, %v1484
        %v1497 = vsub.f32 %v1436, %v1485
        %v1498 = vsub.f32 %v1437, %v1486
        %v1499 = vsub.f32 %v1438, %v1487
        %v1500 = vsub.f32 %v1439, %v1488
        %v1501 = vsub.f32 %v1440, %v1489
        %v1502 = vsub.f32 %v1441, %v1490
        %v1503 = vsub.f32 %v1442, %v1491
        %v1504 = vsub.f32 %v1443, %v1492
        %v1505 = vsub.f32 %v1444, %v1493
        %v1506 = vsub.f32 %v1445, %v1494
        %v1507 = vsub.f32 %v1446, %v1495
        %v1508 = vsub.f32 %v1447, %v1496
        %v1509 = vmul.f32 %v1497, 1.442695
        %v1510 = vpow.pop %v1509
        %v1511 = vmul.f32 %v1498, 1.442695
        %v1512 = vpow.pop %v1511
        %v1513 = vmul.f32 %v1499, 1.442695
        %v1514 = vpow.pop %v1513
        %v1515 = vmul.f32 %v1500, 1.442695
        %v1516 = vpow.pop %v1515
        %v1517 = vmul.f32 %v1501, 1.442695
        %v1518 = vpow.pop %v1517
        %v1519 = vmul.f32 %v1502, 1.442695
        %v1520 = vpow.pop %v1519
        %v1521 = vmul.f32 %v1503, 1.442695
        %v1522 = vpow.pop %v1521
        %v1523 = vmul.f32 %v1504, 1.442695
        %v1524 = vpow.pop %v1523
        %v1525 = vmul.f32 %v1505, 1.442695
        %v1526 = vpow.pop %v1525
        %v1527 = vmul.f32 %v1506, 1.442695
        %v1528 = vpow.pop %v1527
        %v1529 = vmul.f32 %v1507, 1.442695
        %v1530 = vpow.pop %v1529
        %v1531 = vmul.f32 %v1508, 1.442695
        %v1532 = vpow.pop %v1531
        %1534 = vset.pattern.permute.xlu0 0
        %1535 = vperm.xlu0 %1534, %v1485
        %v1536 = vpop.permute.xlu0 %1535
        %1539 = vset.pattern.permute.xlu0 0
        %1540 = vperm.xlu0 %1539, %v1486
        %v1541 = vpop.permute.xlu0 %1540
        %1544 = vset.pattern.permute.xlu0 0
        %1545 = vperm.xlu0 %1544, %v1487
        %v1546 = vpop.permute.xlu0 %1545
        %1549 = vset.pattern.permute.xlu0 0
        %1550 = vperm.xlu0 %1549, %v1488
        %v1551 = vpop.permute.xlu0 %1550
        %1554 = vset.pattern.permute.xlu0 0
        %1555 = vperm.xlu0 %1554, %v1489
        %v1556 = vpop.permute.xlu0 %1555
        %1559 = vset.pattern.permute.xlu0 0
        %1560 = vperm.xlu0 %1559, %v1490
        %v1561 = vpop.permute.xlu0 %1560
        %1564 = vset.pattern.permute.xlu0 0
        %1565 = vperm.xlu0 %1564, %v1491
        %v1566 = vpop.permute.xlu0 %1565
        %1569 = vset.pattern.permute.xlu0 0
        %1570 = vperm.xlu0 %1569, %v1492
        %v1571 = vpop.permute.xlu0 %1570
        %1574 = vset.pattern.permute.xlu0 0
        %1575 = vperm.xlu0 %1574, %v1493
        %v1576 = vpop.permute.xlu0 %1575
        %1579 = vset.pattern.permute.xlu0 0
        %1580 = vperm.xlu0 %1579, %v1494
        %v1581 = vpop.permute.xlu0 %1580
        %1584 = vset.pattern.permute.xlu0 0
        %1585 = vperm.xlu0 %1584, %v1495
        %v1586 = vpop.permute.xlu0 %1585
        %1589 = vset.pattern.permute.xlu0 0
        %1590 = vperm.xlu0 %1589, %v1496
        %v1591 = vpop.permute.xlu0 %1590
        %v1593 = vsub.f32 %v1424, %v1536
        %v1594 = vsub.f32 %v1425, %v1541
        %v1595 = vsub.f32 %v1426, %v1546
        %v1596 = vsub.f32 %v1427, %v1551
        %v1597 = vsub.f32 %v1428, %v1556
        %v1598 = vsub.f32 %v1429, %v1561
        %v1599 = vsub.f32 %v1430, %v1566
        %v1600 = vsub.f32 %v1431, %v1571
        %v1601 = vsub.f32 %v1432, %v1576
        %v1602 = vsub.f32 %v1433, %v1581
        %v1603 = vsub.f32 %v1434, %v1586
        %v1604 = vsub.f32 %v1435, %v1591
        %v1605 = vmul.f32 %v1593, 1.442695
        %v1606 = vpow.pop %v1605
        %v1607 = vmul.f32 %v1594, 1.442695
        %v1608 = vpow.pop %v1607
        %v1609 = vmul.f32 %v1595, 1.442695
        %v1610 = vpow.pop %v1609
        %v1611 = vmul.f32 %v1596, 1.442695
        %v1612 = vpow.pop %v1611
        %v1613 = vmul.f32 %v1597, 1.442695
        %v1614 = vpow.pop %v1613
        %v1615 = vmul.f32 %v1598, 1.442695
        %v1616 = vpow.pop %v1615
        %v1617 = vmul.f32 %v1599, 1.442695
        %v1618 = vpow.pop %v1617
        %v1619 = vmul.f32 %v1600, 1.442695
        %v1620 = vpow.pop %v1619
        %v1621 = vmul.f32 %v1601, 1.442695
        %v1622 = vpow.pop %v1621
        %v1623 = vmul.f32 %v1602, 1.442695
        %v1624 = vpow.pop %v1623
        %v1625 = vmul.f32 %v1603, 1.442695
        %v1626 = vpow.pop %v1625
        %v1627 = vmul.f32 %v1604, 1.442695
        %v1628 = vpow.pop %v1627
        %v1629 = vld [vmem:[#allocation3] sm:$0xff]
        %v1630 = vld [vmem:[#allocation3 + $0x8] sm:$0xff]
        %v1631 = vld [vmem:[#allocation3 + $0x10] sm:$0xff]
        %v1632 = vld [vmem:[#allocation3 + $0x18] sm:$0xff]
        %v1633 = vld [vmem:[#allocation3 + $0x20] sm:$0xff]
        %v1634 = vld [vmem:[#allocation3 + $0x28] sm:$0xff]
        %v1635 = vld [vmem:[#allocation3 + $0x30] sm:$0xff]
        %v1636 = vld [vmem:[#allocation3 + $0x38] sm:$0xff]
        %v1637 = vld [vmem:[#allocation3 + $0x40] sm:$0xff]
        %v1638 = vld [vmem:[#allocation3 + $0x48] sm:$0xff]
        %v1639 = vld [vmem:[#allocation3 + $0x50] sm:$0xff]
        %v1640 = vld [vmem:[#allocation3 + $0x58] sm:$0xff]
        %v1641 = vmul.f32 %v1510, %v1629
        %v1642 = vmul.f32 %v1512, %v1630
        %v1643 = vmul.f32 %v1514, %v1631
        %v1644 = vmul.f32 %v1516, %v1632
        %v1645 = vmul.f32 %v1518, %v1633
        %v1646 = vmul.f32 %v1520, %v1634
        %v1647 = vmul.f32 %v1522, %v1635
        %v1648 = vmul.f32 %v1524, %v1636
        %v1649 = vmul.f32 %v1526, %v1637
        %v1650 = vmul.f32 %v1528, %v1638
        %v1651 = vmul.f32 %v1530, %v1639
        %v1652 = vmul.f32 %v1532, %v1640
        %v1653 = vsel %vm1448, %v1606, 0.0
        %1654 = vadd.xlane.f32.xlu0 %v1653
        %v1655 = vpop.xlane.xlu0 %1654
        %v1656 = vsel %vm1448, %v1608, 0.0
        %1657 = vadd.xlane.f32.xlu0 %v1656
        %v1658 = vpop.xlane.xlu0 %1657
        %v1659 = vsel %vm1448, %v1610, 0.0
        %1660 = vadd.xlane.f32.xlu0 %v1659
        %v1661 = vpop.xlane.xlu0 %1660
        %v1662 = vsel %vm1448, %v1612, 0.0
        %1663 = vadd.xlane.f32.xlu0 %v1662
        %v1664 = vpop.xlane.xlu0 %1663
        %v1665 = vsel %vm1448, %v1614, 0.0
        %1666 = vadd.xlane.f32.xlu0 %v1665
        %v1667 = vpop.xlane.xlu0 %1666
        %v1668 = vsel %vm1448, %v1616, 0.0
        %1669 = vadd.xlane.f32.xlu0 %v1668
        %v1670 = vpop.xlane.xlu0 %1669
        %v1671 = vsel %vm1448, %v1618, 0.0
        %1672 = vadd.xlane.f32.xlu0 %v1671
        %v1673 = vpop.xlane.xlu0 %1672
        %v1674 = vsel %vm1448, %v1620, 0.0
        %1675 = vadd.xlane.f32.xlu0 %v1674
        %v1676 = vpop.xlane.xlu0 %1675
        %v1677 = vsel %vm1448, %v1622, 0.0
        %1678 = vadd.xlane.f32.xlu0 %v1677
        %v1679 = vpop.xlane.xlu0 %1678
        %v1680 = vsel %vm1448, %v1624, 0.0
        %1681 = vadd.xlane.f32.xlu0 %v1680
        %v1682 = vpop.xlane.xlu0 %1681
        %v1683 = vsel %vm1448, %v1626, 0.0
        %1684 = vadd.xlane.f32.xlu0 %v1683
        %v1685 = vpop.xlane.xlu0 %1684
        %v1686 = vsel %vm1448, %v1628, 0.0
        %1687 = vadd.xlane.f32.xlu0 %v1686
        %v1688 = vpop.xlane.xlu0 %1687
        %v1689 = vadd.f32 %v1641, %v1655
        %v1690 = vadd.f32 %v1642, %v1658
        %v1691 = vadd.f32 %v1643, %v1661
        %v1692 = vadd.f32 %v1644, %v1664
        %v1693 = vadd.f32 %v1645, %v1667
        %v1694 = vadd.f32 %v1646, %v1670
        %v1695 = vadd.f32 %v1647, %v1673
        %v1696 = vadd.f32 %v1648, %v1676
        %v1697 = vadd.f32 %v1649, %v1679
        %v1698 = vadd.f32 %v1650, %v1682
        %v1699 = vadd.f32 %v1651, %v1685
        %v1700 = vadd.f32 %v1652, %v1688
        %vm1701 = vcmask 7168
        %1702 = vst.msk [vmem:[#allocation3] sm:$0xff] %vm1701, %v1689
        %1703 = vst.msk [vmem:[#allocation3 + $0x8] sm:$0xff] %vm1701, %v1690
        %1704 = vst.msk [vmem:[#allocation3 + $0x10] sm:$0xff] %vm1701, %v1691
        %1705 = vst.msk [vmem:[#allocation3 + $0x18] sm:$0xff] %vm1701, %v1692
        %1706 = vst.msk [vmem:[#allocation3 + $0x20] sm:$0xff] %vm1701, %v1693
        %1707 = vst.msk [vmem:[#allocation3 + $0x28] sm:$0xff] %vm1701, %v1694
        %1708 = vst.msk [vmem:[#allocation3 + $0x30] sm:$0xff] %vm1701, %v1695
        %1709 = vst.msk [vmem:[#allocation3 + $0x38] sm:$0xff] %vm1701, %v1696
        %1710 = vst.msk [vmem:[#allocation3 + $0x40] sm:$0xff] %vm1701, %v1697
        %1711 = vst.msk [vmem:[#allocation3 + $0x48] sm:$0xff] %vm1701, %v1698
        %1712 = vst.msk [vmem:[#allocation3 + $0x50] sm:$0xff] %vm1701, %v1699
        %1713 = vst.msk [vmem:[#allocation3 + $0x58] sm:$0xff] %vm1701, %v1700
        %v1714 = vld [vmem:[%s309] sm:$0xff]
        %v1715 = vld [vmem:[%s309 + $0x8] sm:$0xff]
        %v1716 = vld [vmem:[%s309 + $0x10] sm:$0xff]
        %v1717 = vld [vmem:[%s309 + $0x18] sm:$0xff]
        %v1718 = vld [vmem:[%s309 + $0x20] sm:$0xff]
        %v1719 = vld [vmem:[%s309 + $0x28] sm:$0xff]
        %v1720 = vld [vmem:[%s309 + $0x30] sm:$0xff]
        %v1721 = vld [vmem:[%s309 + $0x38] sm:$0xff]
        %v1722 = vld [vmem:[%s309 + $0x40] sm:$0xff]
        %v1723 = vld [vmem:[%s309 + $0x48] sm:$0xff]
        %v1724 = vld [vmem:[%s309 + $0x50] sm:$0xff]
        %v1725 = vld [vmem:[%s309 + $0x58] sm:$0xff]
        %v1727 = vsel %vm1448, %v1606, 0
        %1729 = vmatprep.subr.mxu0 0.0
        %1730 = vmatpush1.msra.mxu0 %v1714
        %1731 = vmatprep.subr.mxu0 0.0
        %1732 = vmatpush1.msra.mxu0 0.0
        %1733 = vmatprep.subr.mxu0 0.0
        %1734 = vmatpush1.msra.mxu0 0.0
        %1735 = vmatprep.subr.mxu0 0.0
        %1736 = vmatpush1.msra.mxu0 0.0
        %1737 = vmatprep.subr.mxu0 0.0
        %1738 = vmatpush1.msra.mxu0 0.0
        %1739 = vmatprep.subr.mxu0 0.0
        %1740 = vmatpush1.msra.mxu0 0.0
        %1741 = vmatprep.subr.mxu0 0.0
        %1742 = vmatpush1.msra.mxu0 0.0
        %1743 = vmatprep.subr.mxu0 0.0
        %1744 = vmatpush1.msra.mxu0 0.0
        %1745 = vmatprep.subr.mxu0 0.0
        %1746 = vmatpush1.msra.mxu0 0.0
        %1747 = vmatprep.subr.mxu0 0.0
        %1748 = vmatpush1.msra.mxu0 0.0
        %1749 = vmatprep.subr.mxu0 0.0
        %1750 = vmatpush1.msra.mxu0 0.0
        %1751 = vmatprep.subr.mxu0 0.0
        %1752 = vmatpush1.msra.mxu0 0.0
        %1753 = vmatprep.subr.mxu0 0.0
        %1754 = vmatpush1.msra.mxu0 0.0
        %1755 = vmatprep.subr.mxu0 0.0
        %1756 = vmatpush1.msra.mxu0 0.0
        %1757 = vmatprep.subr.mxu0 0.0
        %1758 = vmatpush1.msra.mxu0 0.0
        %1759 = vmatprep.subr.mxu0 0.0
        %1760 = vmatpush1.msra.mxu0 0.0
        %1761 = vmatprep.subr.mxu0 0.0
        %1762 = vmatpush1.msra.mxu0 0.0
        %1763 = vmatprep.subr.mxu0 0.0
        %1764 = vmatpush1.msra.mxu0 0.0
        %1765 = vmatprep.subr.mxu0 0.0
        %1766 = vmatpush1.msra.mxu0 0.0
        %1767 = vmatprep.subr.mxu0 0.0
        %1768 = vmatpush1.msra.mxu0 0.0
        %1769 = vmatprep.subr.mxu0 0.0
        %1770 = vmatpush1.msra.mxu0 0.0
        %1771 = vmatprep.subr.mxu0 0.0
        %1772 = vmatpush1.msra.mxu0 0.0
        %1773 = vmatprep.subr.mxu0 0.0
        %1774 = vmatpush1.msra.mxu0 0.0
        %1775 = vmatprep.subr.mxu0 0.0
        %1776 = vmatpush1.msra.mxu0 0.0
        %1777 = vmatprep.subr.mxu0 0.0
        %1778 = vmatpush1.msra.mxu0 0.0
        %1779 = vmatprep.subr.mxu0 0.0
        %1780 = vmatpush1.msra.mxu0 0.0
        %1781 = vmatprep.subr.mxu0 0.0
        %1782 = vmatpush1.msra.mxu0 0.0
        %1783 = vmatprep.subr.mxu0 0.0
        %1784 = vmatpush1.msra.mxu0 0.0
        %1785 = vmatprep.subr.mxu0 0.0
        %1786 = vmatpush1.msra.mxu0 0.0
        %1787 = vmatprep.subr.mxu0 0.0
        %1788 = vmatpush1.msra.mxu0 0.0
        %1789 = vmatprep.subr.mxu0 0.0
        %1790 = vmatpush1.msra.mxu0 0.0
        %1791 = vmatprep.subr.mxu0 0.0
        %1792 = vmatpush1.msra.mxu0 0.0
        %1793 = vmatprep.mubr.f32.mxu0 0.0
        %1794 = vmatmul.mubr.f32.gmra.mrb[0].mxu0 %v1727
        %v1795 = vpop.f32.mrb[0].mxu0
        %v1796 = vadd.f32 0.0, %v1795
        %v1797 = vpop.f32.mrb[0].mxu0
        %1798 = vdwg.mxu0
        %v1800 = vsel %vm1448, %v1608, 0
        %1802 = vmatprep.subr.mxu0 0.0
        %1803 = vmatpush1.msra.mxu0 %v1715
        %1804 = vmatprep.subr.mxu0 0.0
        %1805 = vmatpush1.msra.mxu0 0.0
        %1806 = vmatprep.subr.mxu0 0.0
        %1807 = vmatpush1.msra.mxu0 0.0
        %1808 = vmatprep.subr.mxu0 0.0
        %1809 = vmatpush1.msra.mxu0 0.0
        %1810 = vmatprep.subr.mxu0 0.0
        %1811 = vmatpush1.msra.mxu0 0.0
        %1812 = vmatprep.subr.mxu0 0.0
        %1813 = vmatpush1.msra.mxu0 0.0
        %1814 = vmatprep.subr.mxu0 0.0
        %1815 = vmatpush1.msra.mxu0 0.0
        %1816 = vmatprep.subr.mxu0 0.0
        %1817 = vmatpush1.msra.mxu0 0.0
        %1818 = vmatprep.subr.mxu0 0.0
        %1819 = vmatpush1.msra.mxu0 0.0
        %1820 = vmatprep.subr.mxu0 0.0
        %1821 = vmatpush1.msra.mxu0 0.0
        %1822 = vmatprep.subr.mxu0 0.0
        %1823 = vmatpush1.msra.mxu0 0.0
        %1824 = vmatprep.subr.mxu0 0.0
        %1825 = vmatpush1.msra.mxu0 0.0
        %1826 = vmatprep.subr.mxu0 0.0
        %1827 = vmatpush1.msra.mxu0 0.0
        %1828 = vmatprep.subr.mxu0 0.0
        %1829 = vmatpush1.msra.mxu0 0.0
        %1830 = vmatprep.subr.mxu0 0.0
        %1831 = vmatpush1.msra.mxu0 0.0
        %1832 = vmatprep.subr.mxu0 0.0
        %1833 = vmatpush1.msra.mxu0 0.0
        %1834 = vmatprep.subr.mxu0 0.0
        %1835 = vmatpush1.msra.mxu0 0.0
        %1836 = vmatprep.subr.mxu0 0.0
        %1837 = vmatpush1.msra.mxu0 0.0
        %1838 = vmatprep.subr.mxu0 0.0
        %1839 = vmatpush1.msra.mxu0 0.0
        %1840 = vmatprep.subr.mxu0 0.0
        %1841 = vmatpush1.msra.mxu0 0.0
        %1842 = vmatprep.subr.mxu0 0.0
        %1843 = vmatpush1.msra.mxu0 0.0
        %1844 = vmatprep.subr.mxu0 0.0
        %1845 = vmatpush1.msra.mxu0 0.0
        %1846 = vmatprep.subr.mxu0 0.0
        %1847 = vmatpush1.msra.mxu0 0.0
        %1848 = vmatprep.subr.mxu0 0.0
        %1849 = vmatpush1.msra.mxu0 0.0
        %1850 = vmatprep.subr.mxu0 0.0
        %1851 = vmatpush1.msra.mxu0 0.0
        %1852 = vmatprep.subr.mxu0 0.0
        %1853 = vmatpush1.msra.mxu0 0.0
        %1854 = vmatprep.subr.mxu0 0.0
        %1855 = vmatpush1.msra.mxu0 0.0
        %1856 = vmatprep.subr.mxu0 0.0
        %1857 = vmatpush1.msra.mxu0 0.0
        %1858 = vmatprep.subr.mxu0 0.0
        %1859 = vmatpush1.msra.mxu0 0.0
        %1860 = vmatprep.subr.mxu0 0.0
        %1861 = vmatpush1.msra.mxu0 0.0
        %1862 = vmatprep.subr.mxu0 0.0
        %1863 = vmatpush1.msra.mxu0 0.0
        %1864 = vmatprep.subr.mxu0 0.0
        %1865 = vmatpush1.msra.mxu0 0.0
        %1866 = vmatprep.mubr.f32.mxu0 0.0
        %1867 = vmatmul.mubr.f32.gmra.mrb[0].mxu0 %v1800
        %v1868 = vpop.f32.mrb[0].mxu0
        %v1869 = vadd.f32 0.0, %v1868
        %v1870 = vpop.f32.mrb[0].mxu0
        %1871 = vdwg.mxu0
        %v1873 = vsel %vm1448, %v1610, 0
        %1875 = vmatprep.subr.mxu0 0.0
        %1876 = vmatpush1.msra.mxu0 %v1716
        %1877 = vmatprep.subr.mxu0 0.0
        %1878 = vmatpush1.msra.mxu0 0.0
        %1879 = vmatprep.subr.mxu0 0.0
        %1880 = vmatpush1.msra.mxu0 0.0
        %1881 = vmatprep.subr.mxu0 0.0
        %1882 = vmatpush1.msra.mxu0 0.0
        %1883 = vmatprep.subr.mxu0 0.0
        %1884 = vmatpush1.msra.mxu0 0.0
        %1885 = vmatprep.subr.mxu0 0.0
        %1886 = vmatpush1.msra.mxu0 0.0
        %1887 = vmatprep.subr.mxu0 0.0
        %1888 = vmatpush1.msra.mxu0 0.0
        %1889 = vmatprep.subr.mxu0 0.0
        %1890 = vmatpush1.msra.mxu0 0.0
        %1891 = vmatprep.subr.mxu0 0.0
        %1892 = vmatpush1.msra.mxu0 0.0
        %1893 = vmatprep.subr.mxu0 0.0
        %1894 = vmatpush1.msra.mxu0 0.0
        %1895 = vmatprep.subr.mxu0 0.0
        %1896 = vmatpush1.msra.mxu0 0.0
        %1897 = vmatprep.subr.mxu0 0.0
        %1898 = vmatpush1.msra.mxu0 0.0
        %1899 = vmatprep.subr.mxu0 0.0
        %1900 = vmatpush1.msra.mxu0 0.0
        %1901 = vmatprep.subr.mxu0 0.0
        %1902 = vmatpush1.msra.mxu0 0.0
        %1903 = vmatprep.subr.mxu0 0.0
        %1904 = vmatpush1.msra.mxu0 0.0
        %1905 = vmatprep.subr.mxu0 0.0
        %1906 = vmatpush1.msra.mxu0 0.0
        %1907 = vmatprep.subr.mxu0 0.0
        %1908 = vmatpush1.msra.mxu0 0.0
        %1909 = vmatprep.subr.mxu0 0.0
        %1910 = vmatpush1.msra.mxu0 0.0
        %1911 = vmatprep.subr.mxu0 0.0
        %1912 = vmatpush1.msra.mxu0 0.0
        %1913 = vmatprep.subr.mxu0 0.0
        %1914 = vmatpush1.msra.mxu0 0.0
        %1915 = vmatprep.subr.mxu0 0.0
        %1916 = vmatpush1.msra.mxu0 0.0
        %1917 = vmatprep.subr.mxu0 0.0
        %1918 = vmatpush1.msra.mxu0 0.0
        %1919 = vmatprep.subr.mxu0 0.0
        %1920 = vmatpush1.msra.mxu0 0.0
        %1921 = vmatprep.subr.mxu0 0.0
        %1922 = vmatpush1.msra.mxu0 0.0
        %1923 = vmatprep.subr.mxu0 0.0
        %1924 = vmatpush1.msra.mxu0 0.0
        %1925 = vmatprep.subr.mxu0 0.0
        %1926 = vmatpush1.msra.mxu0 0.0
        %1927 = vmatprep.subr.mxu0 0.0
        %1928 = vmatpush1.msra.mxu0 0.0
        %1929 = vmatprep.subr.mxu0 0.0
        %1930 = vmatpush1.msra.mxu0 0.0
        %1931 = vmatprep.subr.mxu0 0.0
        %1932 = vmatpush1.msra.mxu0 0.0
        %1933 = vmatprep.subr.mxu0 0.0
        %1934 = vmatpush1.msra.mxu0 0.0
        %1935 = vmatprep.subr.mxu0 0.0
        %1936 = vmatpush1.msra.mxu0 0.0
        %1937 = vmatprep.subr.mxu0 0.0
        %1938 = vmatpush1.msra.mxu0 0.0
        %1939 = vmatprep.mubr.f32.mxu0 0.0
        %1940 = vmatmul.mubr.f32.gmra.mrb[0].mxu0 %v1873
        %v1941 = vpop.f32.mrb[0].mxu0
        %v1942 = vadd.f32 0.0, %v1941
        %v1943 = vpop.f32.mrb[0].mxu0
        %1944 = vdwg.mxu0
        %v1946 = vsel %vm1448, %v1612, 0
        %1948 = vmatprep.subr.mxu0 0.0
        %1949 = vmatpush1.msra.mxu0 %v1717
        %1950 = vmatprep.subr.mxu0 0.0
        %1951 = vmatpush1.msra.mxu0 0.0
        %1952 = vmatprep.subr.mxu0 0.0
        %1953 = vmatpush1.msra.mxu0 0.0
        %1954 = vmatprep.subr.mxu0 0.0
        %1955 = vmatpush1.msra.mxu0 0.0
        %1956 = vmatprep.subr.mxu0 0.0
        %1957 = vmatpush1.msra.mxu0 0.0
        %1958 = vmatprep.subr.mxu0 0.0
        %1959 = vmatpush1.msra.mxu0 0.0
        %1960 = vmatprep.subr.mxu0 0.0
        %1961 = vmatpush1.msra.mxu0 0.0
        %1962 = vmatprep.subr.mxu0 0.0
        %1963 = vmatpush1.msra.mxu0 0.0
        %1964 = vmatprep.subr.mxu0 0.0
        %1965 = vmatpush1.msra.mxu0 0.0
        %1966 = vmatprep.subr.mxu0 0.0
        %1967 = vmatpush1.msra.mxu0 0.0
        %1968 = vmatprep.subr.mxu0 0.0
        %1969 = vmatpush1.msra.mxu0 0.0
        %1970 = vmatprep.subr.mxu0 0.0
        %1971 = vmatpush1.msra.mxu0 0.0
        %1972 = vmatprep.subr.mxu0 0.0
        %1973 = vmatpush1.msra.mxu0 0.0
        %1974 = vmatprep.subr.mxu0 0.0
        %1975 = vmatpush1.msra.mxu0 0.0
        %1976 = vmatprep.subr.mxu0 0.0
        %1977 = vmatpush1.msra.mxu0 0.0
        %1978 = vmatprep.subr.mxu0 0.0
        %1979 = vmatpush1.msra.mxu0 0.0
        %1980 = vmatprep.subr.mxu0 0.0
        %1981 = vmatpush1.msra.mxu0 0.0
        %1982 = vmatprep.subr.mxu0 0.0
        %1983 = vmatpush1.msra.mxu0 0.0
        %1984 = vmatprep.subr.mxu0 0.0
        %1985 = vmatpush1.msra.mxu0 0.0
        %1986 = vmatprep.subr.mxu0 0.0
        %1987 = vmatpush1.msra.mxu0 0.0
        %1988 = vmatprep.subr.mxu0 0.0
        %1989 = vmatpush1.msra.mxu0 0.0
        %1990 = vmatprep.subr.mxu0 0.0
        %1991 = vmatpush1.msra.mxu0 0.0
        %1992 = vmatprep.subr.mxu0 0.0
        %1993 = vmatpush1.msra.mxu0 0.0
        %1994 = vmatprep.subr.mxu0 0.0
        %1995 = vmatpush1.msra.mxu0 0.0
        %1996 = vmatprep.subr.mxu0 0.0
        %1997 = vmatpush1.msra.mxu0 0.0
        %1998 = vmatprep.subr.mxu0 0.0
        %1999 = vmatpush1.msra.mxu0 0.0
        %2000 = vmatprep.subr.mxu0 0.0
        %2001 = vmatpush1.msra.mxu0 0.0
        %2002 = vmatprep.subr.mxu0 0.0
        %2003 = vmatpush1.msra.mxu0 0.0
        %2004 = vmatprep.subr.mxu0 0.0
        %2005 = vmatpush1.msra.mxu0 0.0
        %2006 = vmatprep.subr.mxu0 0.0
        %2007 = vmatpush1.msra.mxu0 0.0
        %2008 = vmatprep.subr.mxu0 0.0
        %2009 = vmatpush1.msra.mxu0 0.0
        %2010 = vmatprep.subr.mxu0 0.0
        %2011 = vmatpush1.msra.mxu0 0.0
        %2012 = vmatprep.mubr.f32.mxu0 0.0
        %2013 = vmatmul.mubr.f32.gmra.mrb[0].mxu0 %v1946
        %v2014 = vpop.f32.mrb[0].mxu0
        %v2015 = vadd.f32 0.0, %v2014
        %v2016 = vpop.f32.mrb[0].mxu0
        %2017 = vdwg.mxu0
        %v2019 = vsel %vm1448, %v1614, 0
        %2021 = vmatprep.subr.mxu0 0.0
        %2022 = vmatpush1.msra.mxu0 %v1718
        %2023 = vmatprep.subr.mxu0 0.0
        %2024 = vmatpush1.msra.mxu0 0.0
        %2025 = vmatprep.subr.mxu0 0.0
        %2026 = vmatpush1.msra.mxu0 0.0
        %2027 = vmatprep.subr.mxu0 0.0
        %2028 = vmatpush1.msra.mxu0 0.0
        %2029 = vmatprep.subr.mxu0 0.0
        %2030 = vmatpush1.msra.mxu0 0.0
        %2031 = vmatprep.subr.mxu0 0.0
        %2032 = vmatpush1.msra.mxu0 0.0
        %2033 = vmatprep.subr.mxu0 0.0
        %2034 = vmatpush1.msra.mxu0 0.0
        %2035 = vmatprep.subr.mxu0 0.0
        %2036 = vmatpush1.msra.mxu0 0.0
        %2037 = vmatprep.subr.mxu0 0.0
        %2038 = vmatpush1.msra.mxu0 0.0
        %2039 = vmatprep.subr.mxu0 0.0
        %2040 = vmatpush1.msra.mxu0 0.0
        %2041 = vmatprep.subr.mxu0 0.0
        %2042 = vmatpush1.msra.mxu0 0.0
        %2043 = vmatprep.subr.mxu0 0.0
        %2044 = vmatpush1.msra.mxu0 0.0
        %2045 = vmatprep.subr.mxu0 0.0
        %2046 = vmatpush1.msra.mxu0 0.0
        %2047 = vmatprep.subr.mxu0 0.0
        %2048 = vmatpush1.msra.mxu0 0.0
        %2049 = vmatprep.subr.mxu0 0.0
        %2050 = vmatpush1.msra.mxu0 0.0
        %2051 = vmatprep.subr.mxu0 0.0
        %2052 = vmatpush1.msra.mxu0 0.0
        %2053 = vmatprep.subr.mxu0 0.0
        %2054 = vmatpush1.msra.mxu0 0.0
        %2055 = vmatprep.subr.mxu0 0.0
        %2056 = vmatpush1.msra.mxu0 0.0
        %2057 = vmatprep.subr.mxu0 0.0
        %2058 = vmatpush1.msra.mxu0 0.0
        %2059 = vmatprep.subr.mxu0 0.0
        %2060 = vmatpush1.msra.mxu0 0.0
        %2061 = vmatprep.subr.mxu0 0.0
        %2062 = vmatpush1.msra.mxu0 0.0
        %2063 = vmatprep.subr.mxu0 0.0
        %2064 = vmatpush1.msra.mxu0 0.0
        %2065 = vmatprep.subr.mxu0 0.0
        %2066 = vmatpush1.msra.mxu0 0.0
        %2067 = vmatprep.subr.mxu0 0.0
        %2068 = vmatpush1.msra.mxu0 0.0
        %2069 = vmatprep.subr.mxu0 0.0
        %2070 = vmatpush1.msra.mxu0 0.0
        %2071 = vmatprep.subr.mxu0 0.0
        %2072 = vmatpush1.msra.mxu0 0.0
        %2073 = vmatprep.subr.mxu0 0.0
        %2074 = vmatpush1.msra.mxu0 0.0
        %2075 = vmatprep.subr.mxu0 0.0
        %2076 = vmatpush1.msra.mxu0 0.0
        %2077 = vmatprep.subr.mxu0 0.0
        %2078 = vmatpush1.msra.mxu0 0.0
        %2079 = vmatprep.subr.mxu0 0.0
        %2080 = vmatpush1.msra.mxu0 0.0
        %2081 = vmatprep.subr.mxu0 0.0
        %2082 = vmatpush1.msra.mxu0 0.0
        %2083 = vmatprep.subr.mxu0 0.0
        %2084 = vmatpush1.msra.mxu0 0.0
        %2085 = vmatprep.mubr.f32.mxu0 0.0
        %2086 = vmatmul.mubr.f32.gmra.mrb[0].mxu0 %v2019
        %v2087 = vpop.f32.mrb[0].mxu0
        %v2088 = vadd.f32 0.0, %v2087
        %v2089 = vpop.f32.mrb[0].mxu0
        %2090 = vdwg.mxu0
        %v2092 = vsel %vm1448, %v1616, 0
        %2094 = vmatprep.subr.mxu0 0.0
        %2095 = vmatpush1.msra.mxu0 %v1719
        %2096 = vmatprep.subr.mxu0 0.0
        %2097 = vmatpush1.msra.mxu0 0.0
        %2098 = vmatprep.subr.mxu0 0.0
        %2099 = vmatpush1.msra.mxu0 0.0
        %2100 = vmatprep.subr.mxu0 0.0
        %2101 = vmatpush1.msra.mxu0 0.0
        %2102 = vmatprep.subr.mxu0 0.0
        %2103 = vmatpush1.msra.mxu0 0.0
        %2104 = vmatprep.subr.mxu0 0.0
        %2105 = vmatpush1.msra.mxu0 0.0
        %2106 = vmatprep.subr.mxu0 0.0
        %2107 = vmatpush1.msra.mxu0 0.0
        %2108 = vmatprep.subr.mxu0 0.0
        %2109 = vmatpush1.msra.mxu0 0.0
        %2110 = vmatprep.subr.mxu0 0.0
        %2111 = vmatpush1.msra.mxu0 0.0
        %2112 = vmatprep.subr.mxu0 0.0
        %2113 = vmatpush1.msra.mxu0 0.0
        %2114 = vmatprep.subr.mxu0 0.0
        %2115 = vmatpush1.msra.mxu0 0.0
        %2116 = vmatprep.subr.mxu0 0.0
        %2117 = vmatpush1.msra.mxu0 0.0
        %2118 = vmatprep.subr.mxu0 0.0
        %2119 = vmatpush1.msra.mxu0 0.0
        %2120 = vmatprep.subr.mxu0 0.0
        %2121 = vmatpush1.msra.mxu0 0.0
        %2122 = vmatprep.subr.mxu0 0.0
        %2123 = vmatpush1.msra.mxu0 0.0
        %2124 = vmatprep.subr.mxu0 0.0
        %2125 = vmatpush1.msra.mxu0 0.0
        %2126 = vmatprep.subr.mxu0 0.0
        %2127 = vmatpush1.msra.mxu0 0.0
        %2128 = vmatprep.subr.mxu0 0.0
        %2129 = vmatpush1.msra.mxu0 0.0
        %2130 = vmatprep.subr.mxu0 0.0
        %2131 = vmatpush1.msra.mxu0 0.0
        %2132 = vmatprep.subr.mxu0 0.0
        %2133 = vmatpush1.msra.mxu0 0.0
        %2134 = vmatprep.subr.mxu0 0.0
        %2135 = vmatpush1.msra.mxu0 0.0
        %2136 = vmatprep.subr.mxu0 0.0
        %2137 = vmatpush1.msra.mxu0 0.0
        %2138 = vmatprep.subr.mxu0 0.0
        %2139 = vmatpush1.msra.mxu0 0.0
        %2140 = vmatprep.subr.mxu0 0.0
        %2141 = vmatpush1.msra.mxu0 0.0
        %2142 = vmatprep.subr.mxu0 0.0
        %2143 = vmatpush1.msra.mxu0 0.0
        %2144 = vmatprep.subr.mxu0 0.0
        %2145 = vmatpush1.msra.mxu0 0.0
        %2146 = vmatprep.subr.mxu0 0.0
        %2147 = vmatpush1.msra.mxu0 0.0
        %2148 = vmatprep.subr.mxu0 0.0
        %2149 = vmatpush1.msra.mxu0 0.0
        %2150 = vmatprep.subr.mxu0 0.0
        %2151 = vmatpush1.msra.mxu0 0.0
        %2152 = vmatprep.subr.mxu0 0.0
        %2153 = vmatpush1.msra.mxu0 0.0
        %2154 = vmatprep.subr.mxu0 0.0
        %2155 = vmatpush1.msra.mxu0 0.0
        %2156 = vmatprep.subr.mxu0 0.0
        %2157 = vmatpush1.msra.mxu0 0.0
        %2158 = vmatprep.mubr.f32.mxu0 0.0
        %2159 = vmatmul.mubr.f32.gmra.mrb[0].mxu0 %v2092
        %v2160 = vpop.f32.mrb[0].mxu0
        %v2161 = vadd.f32 0.0, %v2160
        %v2162 = vpop.f32.mrb[0].mxu0
        %2163 = vdwg.mxu0
        %v2165 = vsel %vm1448, %v1618, 0
        %2167 = vmatprep.subr.mxu0 0.0
        %2168 = vmatpush1.msra.mxu0 %v1720
        %2169 = vmatprep.subr.mxu0 0.0
        %2170 = vmatpush1.msra.mxu0 0.0
        %2171 = vmatprep.subr.mxu0 0.0
        %2172 = vmatpush1.msra.mxu0 0.0
        %2173 = vmatprep.subr.mxu0 0.0
        %2174 = vmatpush1.msra.mxu0 0.0
        %2175 = vmatprep.subr.mxu0 0.0
        %2176 = vmatpush1.msra.mxu0 0.0
        %2177 = vmatprep.subr.mxu0 0.0
        %2178 = vmatpush1.msra.mxu0 0.0
        %2179 = vmatprep.subr.mxu0 0.0
        %2180 = vmatpush1.msra.mxu0 0.0
        %2181 = vmatprep.subr.mxu0 0.0
        %2182 = vmatpush1.msra.mxu0 0.0
        %2183 = vmatprep.subr.mxu0 0.0
        %2184 = vmatpush1.msra.mxu0 0.0
        %2185 = vmatprep.subr.mxu0 0.0
        %2186 = vmatpush1.msra.mxu0 0.0
        %2187 = vmatprep.subr.mxu0 0.0
        %2188 = vmatpush1.msra.mxu0 0.0
        %2189 = vmatprep.subr.mxu0 0.0
        %2190 = vmatpush1.msra.mxu0 0.0
        %2191 = vmatprep.subr.mxu0 0.0
        %2192 = vmatpush1.msra.mxu0 0.0
        %2193 = vmatprep.subr.mxu0 0.0
        %2194 = vmatpush1.msra.mxu0 0.0
        %2195 = vmatprep.subr.mxu0 0.0
        %2196 = vmatpush1.msra.mxu0 0.0
        %2197 = vmatprep.subr.mxu0 0.0
        %2198 = vmatpush1.msra.mxu0 0.0
        %2199 = vmatprep.subr.mxu0 0.0
        %2200 = vmatpush1.msra.mxu0 0.0
        %2201 = vmatprep.subr.mxu0 0.0
        %2202 = vmatpush1.msra.mxu0 0.0
        %2203 = vmatprep.subr.mxu0 0.0
        %2204 = vmatpush1.msra.mxu0 0.0
        %2205 = vmatprep.subr.mxu0 0.0
        %2206 = vmatpush1.msra.mxu0 0.0
        %2207 = vmatprep.subr.mxu0 0.0
        %2208 = vmatpush1.msra.mxu0 0.0
        %2209 = vmatprep.subr.mxu0 0.0
        %2210 = vmatpush1.msra.mxu0 0.0
        %2211 = vmatprep.subr.mxu0 0.0
        %2212 = vmatpush1.msra.mxu0 0.0
        %2213 = vmatprep.subr.mxu0 0.0
        %2214 = vmatpush1.msra.mxu0 0.0
        %2215 = vmatprep.subr.mxu0 0.0
        %2216 = vmatpush1.msra.mxu0 0.0
        %2217 = vmatprep.subr.mxu0 0.0
        %2218 = vmatpush1.msra.mxu0 0.0
        %2219 = vmatprep.subr.mxu0 0.0
        %2220 = vmatpush1.msra.mxu0 0.0
        %2221 = vmatprep.subr.mxu0 0.0
        %2222 = vmatpush1.msra.mxu0 0.0
        %2223 = vmatprep.subr.mxu0 0.0
        %2224 = vmatpush1.msra.mxu0 0.0
        %2225 = vmatprep.subr.mxu0 0.0
        %2226 = vmatpush1.msra.mxu0 0.0
        %2227 = vmatprep.subr.mxu0 0.0
        %2228 = vmatpush1.msra.mxu0 0.0
        %2229 = vmatprep.subr.mxu0 0.0
        %2230 = vmatpush1.msra.mxu0 0.0
        %2231 = vmatprep.mubr.f32.mxu0 0.0
        %2232 = vmatmul.mubr.f32.gmra.mrb[0].mxu0 %v2165
        %v2233 = vpop.f32.mrb[0].mxu0
        %v2234 = vadd.f32 0.0, %v2233
        %v2235 = vpop.f32.mrb[0].mxu0
        %2236 = vdwg.mxu0
        %v2238 = vsel %vm1448, %v1620, 0
        %2240 = vmatprep.subr.mxu0 0.0
        %2241 = vmatpush1.msra.mxu0 %v1721
        %2242 = vmatprep.subr.mxu0 0.0
        %2243 = vmatpush1.msra.mxu0 0.0
        %2244 = vmatprep.subr.mxu0 0.0
        %2245 = vmatpush1.msra.mxu0 0.0
        %2246 = vmatprep.subr.mxu0 0.0
        %2247 = vmatpush1.msra.mxu0 0.0
        %2248 = vmatprep.subr.mxu0 0.0
        %2249 = vmatpush1.msra.mxu0 0.0
        %2250 = vmatprep.subr.mxu0 0.0
        %2251 = vmatpush1.msra.mxu0 0.0
        %2252 = vmatprep.subr.mxu0 0.0
        %2253 = vmatpush1.msra.mxu0 0.0
        %2254 = vmatprep.subr.mxu0 0.0
        %2255 = vmatpush1.msra.mxu0 0.0
        %2256 = vmatprep.subr.mxu0 0.0
        %2257 = vmatpush1.msra.mxu0 0.0
        %2258 = vmatprep.subr.mxu0 0.0
        %2259 = vmatpush1.msra.mxu0 0.0
        %2260 = vmatprep.subr.mxu0 0.0
        %2261 = vmatpush1.msra.mxu0 0.0
        %2262 = vmatprep.subr.mxu0 0.0
        %2263 = vmatpush1.msra.mxu0 0.0
        %2264 = vmatprep.subr.mxu0 0.0
        %2265 = vmatpush1.msra.mxu0 0.0
        %2266 = vmatprep.subr.mxu0 0.0
        %2267 = vmatpush1.msra.mxu0 0.0
        %2268 = vmatprep.subr.mxu0 0.0
        %2269 = vmatpush1.msra.mxu0 0.0
        %2270 = vmatprep.subr.mxu0 0.0
        %2271 = vmatpush1.msra.mxu0 0.0
        %2272 = vmatprep.subr.mxu0 0.0
        %2273 = vmatpush1.msra.mxu0 0.0
        %2274 = vmatprep.subr.mxu0 0.0
        %2275 = vmatpush1.msra.mxu0 0.0
        %2276 = vmatprep.subr.mxu0 0.0
        %2277 = vmatpush1.msra.mxu0 0.0
        %2278 = vmatprep.subr.mxu0 0.0
        %2279 = vmatpush1.msra.mxu0 0.0
        %2280 = vmatprep.subr.mxu0 0.0
        %2281 = vmatpush1.msra.mxu0 0.0
        %2282 = vmatprep.subr.mxu0 0.0
        %2283 = vmatpush1.msra.mxu0 0.0
        %2284 = vmatprep.subr.mxu0 0.0
        %2285 = vmatpush1.msra.mxu0 0.0
        %2286 = vmatprep.subr.mxu0 0.0
        %2287 = vmatpush1.msra.mxu0 0.0
        %2288 = vmatprep.subr.mxu0 0.0
        %2289 = vmatpush1.msra.mxu0 0.0
        %2290 = vmatprep.subr.mxu0 0.0
        %2291 = vmatpush1.msra.mxu0 0.0
        %2292 = vmatprep.subr.mxu0 0.0
        %2293 = vmatpush1.msra.mxu0 0.0
        %2294 = vmatprep.subr.mxu0 0.0
        %2295 = vmatpush1.msra.mxu0 0.0
        %2296 = vmatprep.subr.mxu0 0.0
        %2297 = vmatpush1.msra.mxu0 0.0
        %2298 = vmatprep.subr.mxu0 0.0
        %2299 = vmatpush1.msra.mxu0 0.0
        %2300 = vmatprep.subr.mxu0 0.0
        %2301 = vmatpush1.msra.mxu0 0.0
        %2302 = vmatprep.subr.mxu0 0.0
        %2303 = vmatpush1.msra.mxu0 0.0
        %2304 = vmatprep.mubr.f32.mxu0 0.0
        %2305 = vmatmul.mubr.f32.gmra.mrb[0].mxu0 %v2238
        %v2306 = vpop.f32.mrb[0].mxu0
        %v2307 = vadd.f32 0.0, %v2306
        %v2308 = vpop.f32.mrb[0].mxu0
        %2309 = vdwg.mxu0
        %v2311 = vsel %vm1448, %v1622, 0
        %2313 = vmatprep.subr.mxu0 0.0
        %2314 = vmatpush1.msra.mxu0 %v1722
        %2315 = vmatprep.subr.mxu0 0.0
        %2316 = vmatpush1.msra.mxu0 0.0
        %2317 = vmatprep.subr.mxu0 0.0
        %2318 = vmatpush1.msra.mxu0 0.0
        %2319 = vmatprep.subr.mxu0 0.0
        %2320 = vmatpush1.msra.mxu0 0.0
        %2321 = vmatprep.subr.mxu0 0.0
        %2322 = vmatpush1.msra.mxu0 0.0
        %2323 = vmatprep.subr.mxu0 0.0
        %2324 = vmatpush1.msra.mxu0 0.0
        %2325 = vmatprep.subr.mxu0 0.0
        %2326 = vmatpush1.msra.mxu0 0.0
        %2327 = vmatprep.subr.mxu0 0.0
        %2328 = vmatpush1.msra.mxu0 0.0
        %2329 = vmatprep.subr.mxu0 0.0
        %2330 = vmatpush1.msra.mxu0 0.0
        %2331 = vmatprep.subr.mxu0 0.0
        %2332 = vmatpush1.msra.mxu0 0.0
        %2333 = vmatprep.subr.mxu0 0.0
        %2334 = vmatpush1.msra.mxu0 0.0
        %2335 = vmatprep.subr.mxu0 0.0
        %2336 = vmatpush1.msra.mxu0 0.0
        %2337 = vmatprep.subr.mxu0 0.0
        %2338 = vmatpush1.msra.mxu0 0.0
        %2339 = vmatprep.subr.mxu0 0.0
        %2340 = vmatpush1.msra.mxu0 0.0
        %2341 = vmatprep.subr.mxu0 0.0
        %2342 = vmatpush1.msra.mxu0 0.0
        %2343 = vmatprep.subr.mxu0 0.0
        %2344 = vmatpush1.msra.mxu0 0.0
        %2345 = vmatprep.subr.mxu0 0.0
        %2346 = vmatpush1.msra.mxu0 0.0
        %2347 = vmatprep.subr.mxu0 0.0
        %2348 = vmatpush1.msra.mxu0 0.0
        %2349 = vmatprep.subr.mxu0 0.0
        %2350 = vmatpush1.msra.mxu0 0.0
        %2351 = vmatprep.subr.mxu0 0.0
        %2352 = vmatpush1.msra.mxu0 0.0
        %2353 = vmatprep.subr.mxu0 0.0
        %2354 = vmatpush1.msra.mxu0 0.0
        %2355 = vmatprep.subr.mxu0 0.0
        %2356 = vmatpush1.msra.mxu0 0.0
        %2357 = vmatprep.subr.mxu0 0.0
        %2358 = vmatpush1.msra.mxu0 0.0
        %2359 = vmatprep.subr.mxu0 0.0
        %2360 = vmatpush1.msra.mxu0 0.0
        %2361 = vmatprep.subr.mxu0 0.0
        %2362 = vmatpush1.msra.mxu0 0.0
        %2363 = vmatprep.subr.mxu0 0.0
        %2364 = vmatpush1.msra.mxu0 0.0
        %2365 = vmatprep.subr.mxu0 0.0
        %2366 = vmatpush1.msra.mxu0 0.0
        %2367 = vmatprep.subr.mxu0 0.0
        %2368 = vmatpush1.msra.mxu0 0.0
        %2369 = vmatprep.subr.mxu0 0.0
        %2370 = vmatpush1.msra.mxu0 0.0
        %2371 = vmatprep.subr.mxu0 0.0
        %2372 = vmatpush1.msra.mxu0 0.0
        %2373 = vmatprep.subr.mxu0 0.0
        %2374 = vmatpush1.msra.mxu0 0.0
        %2375 = vmatprep.subr.mxu0 0.0
        %2376 = vmatpush1.msra.mxu0 0.0
        %2377 = vmatprep.mubr.f32.mxu0 0.0
        %2378 = vmatmul.mubr.f32.gmra.mrb[0].mxu0 %v2311
        %v2379 = vpop.f32.mrb[0].mxu0
        %v2380 = vadd.f32 0.0, %v2379
        %v2381 = vpop.f32.mrb[0].mxu0
        %2382 = vdwg.mxu0
        %v2384 = vsel %vm1448, %v1624, 0
        %2386 = vmatprep.subr.mxu0 0.0
        %2387 = vmatpush1.msra.mxu0 %v1723
        %2388 = vmatprep.subr.mxu0 0.0
        %2389 = vmatpush1.msra.mxu0 0.0
        %2390 = vmatprep.subr.mxu0 0.0
        %2391 = vmatpush1.msra.mxu0 0.0
        %2392 = vmatprep.subr.mxu0 0.0
        %2393 = vmatpush1.msra.mxu0 0.0
        %2394 = vmatprep.subr.mxu0 0.0
        %2395 = vmatpush1.msra.mxu0 0.0
        %2396 = vmatprep.subr.mxu0 0.0
        %2397 = vmatpush1.msra.mxu0 0.0
        %2398 = vmatprep.subr.mxu0 0.0
        %2399 = vmatpush1.msra.mxu0 0.0
        %2400 = vmatprep.subr.mxu0 0.0
        %2401 = vmatpush1.msra.mxu0 0.0
        %2402 = vmatprep.subr.mxu0 0.0
        %2403 = vmatpush1.msra.mxu0 0.0
        %2404 = vmatprep.subr.mxu0 0.0
        %2405 = vmatpush1.msra.mxu0 0.0
        %2406 = vmatprep.subr.mxu0 0.0
        %2407 = vmatpush1.msra.mxu0 0.0
        %2408 = vmatprep.subr.mxu0 0.0
        %2409 = vmatpush1.msra.mxu0 0.0
        %2410 = vmatprep.subr.mxu0 0.0
        %2411 = vmatpush1.msra.mxu0 0.0
        %2412 = vmatprep.subr.mxu0 0.0
        %2413 = vmatpush1.msra.mxu0 0.0
        %2414 = vmatprep.subr.mxu0 0.0
        %2415 = vmatpush1.msra.mxu0 0.0
        %2416 = vmatprep.subr.mxu0 0.0
        %2417 = vmatpush1.msra.mxu0 0.0
        %2418 = vmatprep.subr.mxu0 0.0
        %2419 = vmatpush1.msra.mxu0 0.0
        %2420 = vmatprep.subr.mxu0 0.0
        %2421 = vmatpush1.msra.mxu0 0.0
        %2422 = vmatprep.subr.mxu0 0.0
        %2423 = vmatpush1.msra.mxu0 0.0
        %2424 = vmatprep.subr.mxu0 0.0
        %2425 = vmatpush1.msra.mxu0 0.0
        %2426 = vmatprep.subr.mxu0 0.0
        %2427 = vmatpush1.msra.mxu0 0.0
        %2428 = vmatprep.subr.mxu0 0.0
        %2429 = vmatpush1.msra.mxu0 0.0
        %2430 = vmatprep.subr.mxu0 0.0
        %2431 = vmatpush1.msra.mxu0 0.0
        %2432 = vmatprep.subr.mxu0 0.0
        %2433 = vmatpush1.msra.mxu0 0.0
        %2434 = vmatprep.subr.mxu0 0.0
        %2435 = vmatpush1.msra.mxu0 0.0
        %2436 = vmatprep.subr.mxu0 0.0
        %2437 = vmatpush1.msra.mxu0 0.0
        %2438 = vmatprep.subr.mxu0 0.0
        %2439 = vmatpush1.msra.mxu0 0.0
        %2440 = vmatprep.subr.mxu0 0.0
        %2441 = vmatpush1.msra.mxu0 0.0
        %2442 = vmatprep.subr.mxu0 0.0
        %2443 = vmatpush1.msra.mxu0 0.0
        %2444 = vmatprep.subr.mxu0 0.0
        %2445 = vmatpush1.msra.mxu0 0.0
        %2446 = vmatprep.subr.mxu0 0.0
        %2447 = vmatpush1.msra.mxu0 0.0
        %2448 = vmatprep.subr.mxu0 0.0
        %2449 = vmatpush1.msra.mxu0 0.0
        %2450 = vmatprep.mubr.f32.mxu0 0.0
        %2451 = vmatmul.mubr.f32.gmra.mrb[0].mxu0 %v2384
        %v2452 = vpop.f32.mrb[0].mxu0
        %v2453 = vadd.f32 0.0, %v2452
        %v2454 = vpop.f32.mrb[0].mxu0
        %2455 = vdwg.mxu0
        %v2457 = vsel %vm1448, %v1626, 0
        %2459 = vmatprep.subr.mxu0 0.0
        %2460 = vmatpush1.msra.mxu0 %v1724
        %2461 = vmatprep.subr.mxu0 0.0
        %2462 = vmatpush1.msra.mxu0 0.0
        %2463 = vmatprep.subr.mxu0 0.0
        %2464 = vmatpush1.msra.mxu0 0.0
        %2465 = vmatprep.subr.mxu0 0.0
        %2466 = vmatpush1.msra.mxu0 0.0
        %2467 = vmatprep.subr.mxu0 0.0
        %2468 = vmatpush1.msra.mxu0 0.0
        %2469 = vmatprep.subr.mxu0 0.0
        %2470 = vmatpush1.msra.mxu0 0.0
        %2471 = vmatprep.subr.mxu0 0.0
        %2472 = vmatpush1.msra.mxu0 0.0
        %2473 = vmatprep.subr.mxu0 0.0
        %2474 = vmatpush1.msra.mxu0 0.0
        %2475 = vmatprep.subr.mxu0 0.0
        %2476 = vmatpush1.msra.mxu0 0.0
        %2477 = vmatprep.subr.mxu0 0.0
        %2478 = vmatpush1.msra.mxu0 0.0
        %2479 = vmatprep.subr.mxu0 0.0
        %2480 = vmatpush1.msra.mxu0 0.0
        %2481 = vmatprep.subr.mxu0 0.0
        %2482 = vmatpush1.msra.mxu0 0.0
        %2483 = vmatprep.subr.mxu0 0.0
        %2484 = vmatpush1.msra.mxu0 0.0
        %2485 = vmatprep.subr.mxu0 0.0
        %2486 = vmatpush1.msra.mxu0 0.0
        %2487 = vmatprep.subr.mxu0 0.0
        %2488 = vmatpush1.msra.mxu0 0.0
        %2489 = vmatprep.subr.mxu0 0.0
        %2490 = vmatpush1.msra.mxu0 0.0
        %2491 = vmatprep.subr.mxu0 0.0
        %2492 = vmatpush1.msra.mxu0 0.0
        %2493 = vmatprep.subr.mxu0 0.0
        %2494 = vmatpush1.msra.mxu0 0.0
        %2495 = vmatprep.subr.mxu0 0.0
        %2496 = vmatpush1.msra.mxu0 0.0
        %2497 = vmatprep.subr.mxu0 0.0
        %2498 = vmatpush1.msra.mxu0 0.0
        %2499 = vmatprep.subr.mxu0 0.0
        %2500 = vmatpush1.msra.mxu0 0.0
        %2501 = vmatprep.subr.mxu0 0.0
        %2502 = vmatpush1.msra.mxu0 0.0
        %2503 = vmatprep.subr.mxu0 0.0
        %2504 = vmatpush1.msra.mxu0 0.0
        %2505 = vmatprep.subr.mxu0 0.0
        %2506 = vmatpush1.msra.mxu0 0.0
        %2507 = vmatprep.subr.mxu0 0.0
        %2508 = vmatpush1.msra.mxu0 0.0
        %2509 = vmatprep.subr.mxu0 0.0
        %2510 = vmatpush1.msra.mxu0 0.0
        %2511 = vmatprep.subr.mxu0 0.0
        %2512 = vmatpush1.msra.mxu0 0.0
        %2513 = vmatprep.subr.mxu0 0.0
        %2514 = vmatpush1.msra.mxu0 0.0
        %2515 = vmatprep.subr.mxu0 0.0
        %2516 = vmatpush1.msra.mxu0 0.0
        %2517 = vmatprep.subr.mxu0 0.0
        %2518 = vmatpush1.msra.mxu0 0.0
        %2519 = vmatprep.subr.mxu0 0.0
        %2520 = vmatpush1.msra.mxu0 0.0
        %2521 = vmatprep.subr.mxu0 0.0
        %2522 = vmatpush1.msra.mxu0 0.0
        %2523 = vmatprep.mubr.f32.mxu0 0.0
        %2524 = vmatmul.mubr.f32.gmra.mrb[0].mxu0 %v2457
        %v2525 = vpop.f32.mrb[0].mxu0
        %v2526 = vadd.f32 0.0, %v2525
        %v2527 = vpop.f32.mrb[0].mxu0
        %2528 = vdwg.mxu0
        %v2530 = vsel %vm1448, %v1628, 0
        %2532 = vmatprep.subr.mxu0 0.0
        %2533 = vmatpush1.msra.mxu0 %v1725
        %2534 = vmatprep.subr.mxu0 0.0
        %2535 = vmatpush1.msra.mxu0 0.0
        %2536 = vmatprep.subr.mxu0 0.0
        %2537 = vmatpush1.msra.mxu0 0.0
        %2538 = vmatprep.subr.mxu0 0.0
        %2539 = vmatpush1.msra.mxu0 0.0
        %2540 = vmatprep.subr.mxu0 0.0
        %2541 = vmatpush1.msra.mxu0 0.0
        %2542 = vmatprep.subr.mxu0 0.0
        %2543 = vmatpush1.msra.mxu0 0.0
        %2544 = vmatprep.subr.mxu0 0.0
        %2545 = vmatpush1.msra.mxu0 0.0
        %2546 = vmatprep.subr.mxu0 0.0
        %2547 = vmatpush1.msra.mxu0 0.0
        %2548 = vmatprep.subr.mxu0 0.0
        %2549 = vmatpush1.msra.mxu0 0.0
        %2550 = vmatprep.subr.mxu0 0.0
        %2551 = vmatpush1.msra.mxu0 0.0
        %2552 = vmatprep.subr.mxu0 0.0
        %2553 = vmatpush1.msra.mxu0 0.0
        %2554 = vmatprep.subr.mxu0 0.0
        %2555 = vmatpush1.msra.mxu0 0.0
        %2556 = vmatprep.subr.mxu0 0.0
        %2557 = vmatpush1.msra.mxu0 0.0
        %2558 = vmatprep.subr.mxu0 0.0
        %2559 = vmatpush1.msra.mxu0 0.0
        %2560 = vmatprep.subr.mxu0 0.0
        %2561 = vmatpush1.msra.mxu0 0.0
        %2562 = vmatprep.subr.mxu0 0.0
        %2563 = vmatpush1.msra.mxu0 0.0
        %2564 = vmatprep.subr.mxu0 0.0
        %2565 = vmatpush1.msra.mxu0 0.0
        %2566 = vmatprep.subr.mxu0 0.0
        %2567 = vmatpush1.msra.mxu0 0.0
        %2568 = vmatprep.subr.mxu0 0.0
        %2569 = vmatpush1.msra.mxu0 0.0
        %2570 = vmatprep.subr.mxu0 0.0
        %2571 = vmatpush1.msra.mxu0 0.0
        %2572 = vmatprep.subr.mxu0 0.0
        %2573 = vmatpush1.msra.mxu0 0.0
        %2574 = vmatprep.subr.mxu0 0.0
        %2575 = vmatpush1.msra.mxu0 0.0
        %2576 = vmatprep.subr.mxu0 0.0
        %2577 = vmatpush1.msra.mxu0 0.0
        %2578 = vmatprep.subr.mxu0 0.0
        %2579 = vmatpush1.msra.mxu0 0.0
        %2580 = vmatprep.subr.mxu0 0.0
        %2581 = vmatpush1.msra.mxu0 0.0
        %2582 = vmatprep.subr.mxu0 0.0
        %2583 = vmatpush1.msra.mxu0 0.0
        %2584 = vmatprep.subr.mxu0 0.0
        %2585 = vmatpush1.msra.mxu0 0.0
        %2586 = vmatprep.subr.mxu0 0.0
        %2587 = vmatpush1.msra.mxu0 0.0
        %2588 = vmatprep.subr.mxu0 0.0
        %2589 = vmatpush1.msra.mxu0 0.0
        %2590 = vmatprep.subr.mxu0 0.0
        %2591 = vmatpush1.msra.mxu0 0.0
        %2592 = vmatprep.subr.mxu0 0.0
        %2593 = vmatpush1.msra.mxu0 0.0
        %2594 = vmatprep.subr.mxu0 0.0
        %2595 = vmatpush1.msra.mxu0 0.0
        %2596 = vmatprep.mubr.f32.mxu0 0.0
        %2597 = vmatmul.mubr.f32.gmra.mrb[0].mxu0 %v2530
        %v2598 = vpop.f32.mrb[0].mxu0
        %v2599 = vadd.f32 0.0, %v2598
        %v2600 = vpop.f32.mrb[0].mxu0
        %2601 = vdwg.mxu0
        %v2602 = vld [vmem:[#allocation4] sm:$0xff]
        %v2603 = vld [vmem:[#allocation4 + $0x8] sm:$0xff]
        %v2604 = vld [vmem:[#allocation4 + $0x10] sm:$0xff]
        %v2605 = vld [vmem:[#allocation4 + $0x18] sm:$0xff]
        %v2606 = vld [vmem:[#allocation4 + $0x20] sm:$0xff]
        %v2607 = vld [vmem:[#allocation4 + $0x28] sm:$0xff]
        %v2608 = vld [vmem:[#allocation4 + $0x30] sm:$0xff]
        %v2609 = vld [vmem:[#allocation4 + $0x38] sm:$0xff]
        %v2610 = vld [vmem:[#allocation4 + $0x40] sm:$0xff]
        %v2611 = vld [vmem:[#allocation4 + $0x48] sm:$0xff]
        %v2612 = vld [vmem:[#allocation4 + $0x50] sm:$0xff]
        %v2613 = vld [vmem:[#allocation4 + $0x58] sm:$0xff]
        %2615 = vset.pattern.permute.xlu0 0
        %2616 = vperm.xlu0 %2615, %v1510
        %v2617 = vpop.permute.xlu0 %2616
        %2620 = vset.pattern.permute.xlu0 0
        %2621 = vperm.xlu0 %2620, %v1512
        %v2622 = vpop.permute.xlu0 %2621
        %2625 = vset.pattern.permute.xlu0 0
        %2626 = vperm.xlu0 %2625, %v1514
        %v2627 = vpop.permute.xlu0 %2626
        %2630 = vset.pattern.permute.xlu0 0
        %2631 = vperm.xlu0 %2630, %v1516
        %v2632 = vpop.permute.xlu0 %2631
        %2635 = vset.pattern.permute.xlu0 0
        %2636 = vperm.xlu0 %2635, %v1518
        %v2637 = vpop.permute.xlu0 %2636
        %2640 = vset.pattern.permute.xlu0 0
        %2641 = vperm.xlu0 %2640, %v1520
        %v2642 = vpop.permute.xlu0 %2641
        %2645 = vset.pattern.permute.xlu0 0
        %2646 = vperm.xlu0 %2645, %v1522
        %v2647 = vpop.permute.xlu0 %2646
        %2650 = vset.pattern.permute.xlu0 0
        %2651 = vperm.xlu0 %2650, %v1524
        %v2652 = vpop.permute.xlu0 %2651
        %2655 = vset.pattern.permute.xlu0 0
        %2656 = vperm.xlu0 %2655, %v1526
        %v2657 = vpop.permute.xlu0 %2656
        %2660 = vset.pattern.permute.xlu0 0
        %2661 = vperm.xlu0 %2660, %v1528
        %v2662 = vpop.permute.xlu0 %2661
        %2665 = vset.pattern.permute.xlu0 0
        %2666 = vperm.xlu0 %2665, %v1530
        %v2667 = vpop.permute.xlu0 %2666
        %2670 = vset.pattern.permute.xlu0 0
        %2671 = vperm.xlu0 %2670, %v1532
        %v2672 = vpop.permute.xlu0 %2671
        %v2674 = vmul.f32 %v2617, %v2602
        %v2675 = vmul.f32 %v2622, %v2603
        %v2676 = vmul.f32 %v2627, %v2604
        %v2677 = vmul.f32 %v2632, %v2605
        %v2678 = vmul.f32 %v2637, %v2606
        %v2679 = vmul.f32 %v2642, %v2607
        %v2680 = vmul.f32 %v2647, %v2608
        %v2681 = vmul.f32 %v2652, %v2609
        %v2682 = vmul.f32 %v2657, %v2610
        %v2683 = vmul.f32 %v2662, %v2611
        %v2684 = vmul.f32 %v2667, %v2612
        %v2685 = vmul.f32 %v2672, %v2613
        %v2686 = vadd.f32 %v2674, %v1796
        %v2687 = vadd.f32 %v2675, %v1869
        %v2688 = vadd.f32 %v2676, %v1942
        %v2689 = vadd.f32 %v2677, %v2015
        %v2690 = vadd.f32 %v2678, %v2088
        %v2691 = vadd.f32 %v2679, %v2161
        %v2692 = vadd.f32 %v2680, %v2234
        %v2693 = vadd.f32 %v2681, %v2307
        %v2694 = vadd.f32 %v2682, %v2380
        %v2695 = vadd.f32 %v2683, %v2453
        %v2696 = vadd.f32 %v2684, %v2526
        %v2697 = vadd.f32 %v2685, %v2599
        %2698 = vst.msk [vmem:[#allocation4] sm:$0xff] %vm439, %v2686
        %2699 = vst.msk [vmem:[#allocation4 + $0x8] sm:$0xff] %vm439, %v2687
        %2700 = vst.msk [vmem:[#allocation4 + $0x10] sm:$0xff] %vm439, %v2688
        %2701 = vst.msk [vmem:[#allocation4 + $0x18] sm:$0xff] %vm439, %v2689
        %2702 = vst.msk [vmem:[#allocation4 + $0x20] sm:$0xff] %vm439, %v2690
        %2703 = vst.msk [vmem:[#allocation4 + $0x28] sm:$0xff] %vm439, %v2691
        %2704 = vst.msk [vmem:[#allocation4 + $0x30] sm:$0xff] %vm439, %v2692
        %2705 = vst.msk [vmem:[#allocation4 + $0x38] sm:$0xff] %vm439, %v2693
        %2706 = vst.msk [vmem:[#allocation4 + $0x40] sm:$0xff] %vm439, %v2694
        %2707 = vst.msk [vmem:[#allocation4 + $0x48] sm:$0xff] %vm439, %v2695
        %2708 = vst.msk [vmem:[#allocation4 + $0x50] sm:$0xff] %vm439, %v2696
        %2709 = vst.msk [vmem:[#allocation4 + $0x58] sm:$0xff] %vm439, %v2697
        %2710 = vst.msk [vmem:[#allocation2] sm:$0xff] %vm1701, %v1485
        %2711 = vst.msk [vmem:[#allocation2 + $0x8] sm:$0xff] %vm1701, %v1486
        %2712 = vst.msk [vmem:[#allocation2 + $0x10] sm:$0xff] %vm1701, %v1487
        %2713 = vst.msk [vmem:[#allocation2 + $0x18] sm:$0xff] %vm1701, %v1488
        %2714 = vst.msk [vmem:[#allocation2 + $0x20] sm:$0xff] %vm1701, %v1489
        %2715 = vst.msk [vmem:[#allocation2 + $0x28] sm:$0xff] %vm1701, %v1490
        %2716 = vst.msk [vmem:[#allocation2 + $0x30] sm:$0xff] %vm1701, %v1491
        %2717 = vst.msk [vmem:[#allocation2 + $0x38] sm:$0xff] %vm1701, %v1492
        %2718 = vst.msk [vmem:[#allocation2 + $0x40] sm:$0xff] %vm1701, %v1493
        %2719 = vst.msk [vmem:[#allocation2 + $0x48] sm:$0xff] %vm1701, %v1494
        %2720 = vst.msk [vmem:[#allocation2 + $0x50] sm:$0xff] %vm1701, %v1495
        %2721 = vst.msk [vmem:[#allocation2 + $0x58] sm:$0xff] %vm1701, %v1496
        // Predicated region
        $region53: #{scaled_dot_product_attention.1} parent=35 // pred_check
          %p2722 = pneg %p373
        $region54: #{scaled_dot_product_attention.1} parent=35 // pred_check_branch
          %2724 = sbr.rel (%p2722) target = $region56
        $region55: #{scaled_dot_product_attention.1} parent=35 // pred_region
          %v2725 = vld [vmem:[#allocation4] sm:$0xff]
          %v2726 = vld [vmem:[#allocation4 + $0x8] sm:$0xff]
          %v2727 = vld [vmem:[#allocation4 + $0x10] sm:$0xff]
          %v2728 = vld [vmem:[#allocation4 + $0x18] sm:$0xff]
          %v2729 = vld [vmem:[#allocation4 + $0x20] sm:$0xff]
          %v2730 = vld [vmem:[#allocation4 + $0x28] sm:$0xff]
          %v2731 = vld [vmem:[#allocation4 + $0x30] sm:$0xff]
          %v2732 = vld [vmem:[#allocation4 + $0x38] sm:$0xff]
          %v2733 = vld [vmem:[#allocation4 + $0x40] sm:$0xff]
          %v2734 = vld [vmem:[#allocation4 + $0x48] sm:$0xff]
          %v2735 = vld [vmem:[#allocation4 + $0x50] sm:$0xff]
          %v2736 = vld [vmem:[#allocation4 + $0x58] sm:$0xff]
          %v2737 = vld [vmem:[#allocation3] sm:$0xff]
          %v2738 = vld [vmem:[#allocation3 + $0x8] sm:$0xff]
          %v2739 = vld [vmem:[#allocation3 + $0x10] sm:$0xff]
          %v2740 = vld [vmem:[#allocation3 + $0x18] sm:$0xff]
          %v2741 = vld [vmem:[#allocation3 + $0x20] sm:$0xff]
          %v2742 = vld [vmem:[#allocation3 + $0x28] sm:$0xff]
          %v2743 = vld [vmem:[#allocation3 + $0x30] sm:$0xff]
          %v2744 = vld [vmem:[#allocation3 + $0x38] sm:$0xff]
          %v2745 = vld [vmem:[#allocation3 + $0x40] sm:$0xff]
          %v2746 = vld [vmem:[#allocation3 + $0x48] sm:$0xff]
          %v2747 = vld [vmem:[#allocation3 + $0x50] sm:$0xff]
          %v2748 = vld [vmem:[#allocation3 + $0x58] sm:$0xff]
          %2750 = vset.pattern.permute.xlu0 0
          %2751 = vperm.xlu0 %2750, %v2737
          %v2752 = vpop.permute.xlu0 %2751
          %2755 = vset.pattern.permute.xlu0 0
          %2756 = vperm.xlu0 %2755, %v2738
          %v2757 = vpop.permute.xlu0 %2756
          %2760 = vset.pattern.permute.xlu0 0
          %2761 = vperm.xlu0 %2760, %v2739
          %v2762 = vpop.permute.xlu0 %2761
          %2765 = vset.pattern.permute.xlu0 0
          %2766 = vperm.xlu0 %2765, %v2740
          %v2767 = vpop.permute.xlu0 %2766
          %2770 = vset.pattern.permute.xlu0 0
          %2771 = vperm.xlu0 %2770, %v2741
          %v2772 = vpop.permute.xlu0 %2771
          %2775 = vset.pattern.permute.xlu0 0
          %2776 = vperm.xlu0 %2775, %v2742
          %v2777 = vpop.permute.xlu0 %2776
          %2780 = vset.pattern.permute.xlu0 0
          %2781 = vperm.xlu0 %2780, %v2743
          %v2782 = vpop.permute.xlu0 %2781
          %2785 = vset.pattern.permute.xlu0 0
          %2786 = vperm.xlu0 %2785, %v2744
          %v2787 = vpop.permute.xlu0 %2786
          %2790 = vset.pattern.permute.xlu0 0
          %2791 = vperm.xlu0 %2790, %v2745
          %v2792 = vpop.permute.xlu0 %2791
          %2795 = vset.pattern.permute.xlu0 0
          %2796 = vperm.xlu0 %2795, %v2746
          %v2797 = vpop.permute.xlu0 %2796
          %2800 = vset.pattern.permute.xlu0 0
          %2801 = vperm.xlu0 %2800, %v2747
          %v2802 = vpop.permute.xlu0 %2801
          %2805 = vset.pattern.permute.xlu0 0
          %2806 = vperm.xlu0 %2805, %v2748
          %v2807 = vpop.permute.xlu0 %2806
          %v2809 = vrcp.pop %v2752
          %v2810 = vmul.f32 %v2725, %v2809
          %v2811 = vrcp.pop %v2757
          %v2812 = vmul.f32 %v2726, %v2811
          %v2813 = vrcp.pop %v2762
          %v2814 = vmul.f32 %v2727, %v2813
          %v2815 = vrcp.pop %v2767
          %v2816 = vmul.f32 %v2728, %v2815
          %v2817 = vrcp.pop %v2772
          %v2818 = vmul.f32 %v2729, %v2817
          %v2819 = vrcp.pop %v2777
          %v2820 = vmul.f32 %v2730, %v2819
          %v2821 = vrcp.pop %v2782
          %v2822 = vmul.f32 %v2731, %v2821
          %v2823 = vrcp.pop %v2787
          %v2824 = vmul.f32 %v2732, %v2823
          %v2825 = vrcp.pop %v2792
          %v2826 = vmul.f32 %v2733, %v2825
          %v2827 = vrcp.pop %v2797
          %v2828 = vmul.f32 %v2734, %v2827
          %v2829 = vrcp.pop %v2802
          %v2830 = vmul.f32 %v2735, %v2829
          %v2831 = vrcp.pop %v2807
          %v2832 = vmul.f32 %v2736, %v2831
          %2833 = vst.msk [vmem:[%s354] sm:$0xff] %vm439, %v2810
          %2834 = vst.msk [vmem:[%s354 + $0x8] sm:$0xff] %vm439, %v2812
          %2835 = vst.msk [vmem:[%s354 + $0x10] sm:$0xff] %vm439, %v2814
          %2836 = vst.msk [vmem:[%s354 + $0x18] sm:$0xff] %vm439, %v2816
          %2837 = vst.msk [vmem:[%s354 + $0x20] sm:$0xff] %vm439, %v2818
          %2838 = vst.msk [vmem:[%s354 + $0x28] sm:$0xff] %vm439, %v2820
          %2839 = vst.msk [vmem:[%s354 + $0x30] sm:$0xff] %vm439, %v2822
          %2840 = vst.msk [vmem:[%s354 + $0x38] sm:$0xff] %vm439, %v2824
          %2841 = vst.msk [vmem:[%s354 + $0x40] sm:$0xff] %vm439, %v2826
          %2842 = vst.msk [vmem:[%s354 + $0x48] sm:$0xff] %vm439, %v2828
          %2843 = vst.msk [vmem:[%s354 + $0x50] sm:$0xff] %vm439, %v2830
          %2844 = vst.msk [vmem:[%s354 + $0x58] sm:$0xff] %vm439, %v2832
        $region56: #{scaled_dot_product_attention.1} parent=35 // pred_fallthru
          _
        %s2845 = sand.u32 %s167, 1
        %s2846 = scalar_lea.sflag [#allocation7], %s2845
        %s2847 = sand.u32 %s167, 1
        %s2848 = smul.addr %s2847, 96
        %s2849 = scalar_lea.vmem [#allocation11], %s2848
        // Predicated region
        $region57: #{scaled_dot_product_attention.1} parent=35 // pred_check
          %p2850 = pneg %p177
        $region58: #{scaled_dot_product_attention.1} parent=35 // pred_check_branch
          %2852 = sbr.rel (%p2850) target = $region60
        $region59: #{scaled_dot_product_attention.1} parent=35 // pred_region
          %s2853 = smul.u32 12, %s29
          %s2855 = ssub.s32 1536, 1536
          %2856 = vsyncadd %s2846, %s2855
          %s2857 = sadd.s32 %s30, %s2853
          %s2858 = smul.addr %s2857, 128
          %s2859 = scalar_lea.hbm %s4, %s2858
          %s2860 = sshll.u32 %s2849, 4
          %s2861 = int_to_ptr.vmem [resolvable:$true] %s2860
          %2866 = dma.vmem_to_hbm [thread:$0]  %s2861, 1536, %s2859, %s2846, 128, 128, 8
        $region60: #{scaled_dot_product_attention.1} parent=35 // pred_fallthru
          _
      $region36: #{scaled_dot_product_attention.1} parent=5 // pred_fallthru
        _
      %p2867 = scmp.le.s32.totalorder 2, %s19
      // Predicated region
      $region61: #{scaled_dot_product_attention.1} parent=5 // pred_check
        %p2868 = pneg %p2867
      $region62: #{scaled_dot_product_attention.1} parent=5 // pred_check_branch
        %2870 = sbr.rel (%p2868) target = $region64
      $region63: #{scaled_dot_product_attention.1} parent=5 // pred_region
        %s2871 = ssub.s32 %s19, 2
        // Predicated region
        $region65: #{scaled_dot_product_attention.1} parent=63 // pred_check
          %p2872 = pneg %p183
        $region66: #{scaled_dot_product_attention.1} parent=63 // pred_check_branch
          %2874 = sbr.rel (%p2872) target = $region68
        $region67: #{scaled_dot_product_attention.1} parent=63 // pred_region
          %s2875 = sand.u32 %s168, 1
          %s2876 = scalar_lea.sflag [#allocation7], %s2875
          %s2877 = sand.u32 %s168, 1
          %s2878 = smul.addr %s2877, 96
          %s2879 = scalar_lea.vmem [#allocation11], %s2878
          %2880 = dma.done %s2876, 1536
        $region68: #{scaled_dot_product_attention.1} parent=63 // pred_fallthru
          _
      $region64: #{scaled_dot_product_attention.1} parent=5 // pred_fallthru
        _
    $region6: #{scaled_dot_product_attention.1} parent=1 // loop_footer
      %s23 = sadd.s32 1, %s19
    $region7: #{scaled_dot_product_attention.1} parent=1 // loop_footer_branch
      %18 = sbr.rel target = $region3
    $region8: #{scaled_dot_product_attention.1} parent=1 // loop_exit
      _
    %2881 = vsyncpa [#allocation6], 1
    %s2882 = scalar_lea.sflag [#allocation6], 1
    %2883 = vsyncpa %s2882, 1
    %2884 = vsyncpa [#allocation9], 1
    %s2885 = scalar_lea.sflag [#allocation9], 1
    %2886 = vsyncpa %s2885, 1
    %2887 = vsyncpa [#allocation7], 1
    %s2888 = scalar_lea.sflag [#allocation7], 1
    %2889 = vsyncpa %s2888, 1

</llo_original>
